<compile_context>
chip_gen: v7x
topology: tpu7x:2x2x1
jax: 0.10.0
libtpu: 0.0.40
codegen_flags: <defaults>
</compile_context>

<pallas_src>
import math

import jax
import jax.numpy as jnp
from jax import lax
from jax.experimental import pallas as pl
from jax.experimental.pallas import tpu as pltpu

_SUBLANE = 8
_LANE = 128


def _round_up(n, m):
    return ((n + m - 1) // m) * m


_VMEM_BUDGET = None


def _vmem_limit_bytes():
    """Per-generation scoped-VMEM budget (~55% of physical, capped at 100 MiB)."""
    global _VMEM_BUDGET
    if _VMEM_BUDGET is None:
        try:
            info = pltpu.get_tpu_info()
            phys = int(getattr(info, "vmem_capacity_bytes", 128 * 1024 * 1024))
        except Exception:  # pragma: no cover - conservative fallback
            phys = 128 * 1024 * 1024
        _VMEM_BUDGET = int(min(phys * 11 // 20, 100 * 1024 * 1024))
    return _VMEM_BUDGET


def _pick_block(n, target, align):
    """Largest multiple of `align` that divides n and is <= target.

    Callers pad n to a multiple of `align` so the full-dim fallback never
    silently requests an oversized block."""
    if n <= target:
        return n
    b = (target // align) * align
    while b >= align:
        if n % b == 0:
            return b
        b -= align
    return n


def _pick_time_chunk(T, B, Din, H, S, budget):
    """Budget-driven time-chunk: keep double-buffered x/out chunks + ig scratch
    + resident weights under the scoped-VMEM budget."""
    G = 4 * H
    fixed = (2 * (2 * S * Din * G) * 2      # w_ih (bf16), double-buffered
             + 2 * (2 * H * G) * 2          # w_hh (bf16), double-buffered
             + 4 * (2 * G) * 2              # bias (f32), double-buffered
             + 4 * (2 * B * H) * 2)         # h/c scratch (f32)
    per_t = (2 * (2 * S * B * Din) * 2      # fwd+bwd x chunks (bf16), double-buffered
             + 2 * (2 * B * H) * 2          # fwd+bwd out chunks (bf16), double-buffered
             + 4 * (2 * B * G))             # ig scratch (f32), single-buffered
    avail = budget - fixed - (2 << 20)      # 2 MiB slack
    tc_max = max(1, avail // per_t) if avail > 0 else 1
    tc_max = int(min(tc_max, 256, T))
    tc = 1
    for c in range(1, tc_max + 1):          # largest divisor of T that fits
        if T % c == 0:
            tc = c
    return tc


# ----------------------------------------------------------------------------
# Kernel 1: fused bidirectional LSTM layer.
#   Inputs : S source tensors x_s (T, B, Din) bf16 (each passed twice: the
#            forward-time chunk stream and the backward-time chunk stream),
#            w_ih (2, S, Din, 4H) bf16, w_hh (2, H, 4H) bf16, b (2, 1, 4H) f32.
#   Outputs: out_f (T, B, H) bf16, out_b (T, B, H) bf16 (both in natural time
#            order; out_b[t] = backward hidden state after reading x[t]).
#   Grid   : single "arbitrary" axis over T-chunks; h/c persist in VMEM scratch.
#   NOTE: for very large H, W_ih should additionally be column-tiled (it is
#   fully VMEM-resident here); fine for typical ELMo hidden sizes.
#   TODO(synk): on v7x the two directions could instead be split across the two
#   TensorCores with a size-2 "parallel" axis; here they are interleaved for
#   ILP on single-TensorCore v5e/v6e.
# ----------------------------------------------------------------------------

def _make_bilstm_kernel(S):
    def kernel(*refs):
        x_refs = refs[:2 * S]  # (xf_0, xb_0, xf_1, xb_1, ...)
        (wih_ref, whh_ref, b_ref, of_ref, ob_ref,
         igf_scr, igb_scr, h_scr, c_scr) = refs[2 * S:]

        TC, B, H = of_ref.shape
        G = 4 * H
        Din = x_refs[0].shape[-1]

        @pl.when(pl.program_id(0) == 0)
        def _():
            h_scr[...] = jnp.zeros_like(h_scr)
            c_scr[...] = jnp.zeros_like(c_scr)

        # --- fused chunk-level input projection (no ig HBM round trip) -------
        xf0 = x_refs[0][...].reshape(TC * B, Din)
        xb0 = x_refs[1][...].reshape(TC * B, Din)
        acc_f = jnp.dot(xf0, wih_ref[0, 0], preferred_element_type=jnp.float32)
        acc_b = jnp.dot(xb0, wih_ref[1, 0], preferred_element_type=jnp.float32)
        for s in range(1, S):
            xf = x_refs[2 * s][...].reshape(TC * B, Din)
            xb = x_refs[2 * s + 1][...].reshape(TC * B, Din)
            acc_f = acc_f + jnp.dot(xf, wih_ref[0, s],
                                    preferred_element_type=jnp.float32)
            acc_b = acc_b + jnp.dot(xb, wih_ref[1, s],
                                    preferred_element_type=jnp.float32)
        igf_scr[...] = (acc_f + b_ref[0]).reshape(TC, B, G)
        igb_scr[...] = (acc_b + b_ref[1]).reshape(TC, B, G)

        # Hoist recurrent weights out of the serial loop.
        whh_f = whh_ref[0]  # (H, 4H) bf16
        whh_b = whh_ref[1]

        def sigm(v):                       # single-EUP sigmoid
            return 0.5 * jnp.tanh(0.5 * v) + 0.5

        def cell(gates, c_prev):           # gates: (B, 4H) f32
            i_g = sigm(gates[:, 0 * H:1 * H])
            f_g = sigm(gates[:, 1 * H:2 * H])
            g_g = jnp.tanh(gates[:, 2 * H:3 * H])
            o_g = sigm(gates[:, 3 * H:4 * H])
            c = f_g * c_prev + i_g * g_g
            h = o_g * jnp.tanh(c)
            return h, c

        def step(s, carry):
            sb = TC - 1 - s                # backward local time within chunk
            gf = igf_scr[s] + jnp.dot(h_scr[0].astype(whh_f.dtype), whh_f,
                                      preferred_element_type=jnp.float32)
            gb = igb_scr[sb] + jnp.dot(h_scr[1].astype(whh_b.dtype), whh_b,
                                       preferred_element_type=jnp.float32)
            hf, cf = cell(gf, c_scr[0])
            hb, cb = cell(gb, c_scr[1])
            h_scr[0] = hf
            c_scr[0] = cf
            h_scr[1] = hb
            c_scr[1] = cb
            of_ref[s] = hf.astype(of_ref.dtype)
            ob_ref[sb] = hb.astype(ob_ref.dtype)
            return carry

        lax.fori_loop(0, TC, step, 0)

    return kernel


def bilstm_layer(x_sources, w_ih, w_hh, b):
    """x_sources: list of (T, B, Din) bf16. Returns (out_f, out_b) (T, B, H) bf16."""
    T, B, Din = x_sources[0].shape
    S = len(x_sources)
    H = w_hh.shape[1]
    G = 4 * H

    budget = _vmem_limit_bytes()
    TC = _pick_time_chunk(T, B, Din, H, S, budget)
    NC = T // TC

    def fwd_idx(i):
        return (i, 0, 0)

    def bwd_idx(i):
        return (NC - 1 - i, 0, 0)

    in_specs = []
    args = []
    for s in range(S):
        in_specs.append(pl.BlockSpec((TC, B, Din), fwd_idx))
        args.append(x_sources[s])
        in_specs.append(pl.BlockSpec((TC, B, Din), bwd_idx))
        args.append(x_sources[s])
    in_specs += [
        pl.BlockSpec((2, S, Din, G), lambda i: (0, 0, 0, 0)),
        pl.BlockSpec((2, H, G), lambda i: (0, 0, 0)),
        pl.BlockSpec((2, 1, G), lambda i: (0, 0, 0)),
    ]
    args += [w_ih, w_hh, b]

    flops = 4 * T * B * G * (S * Din + H) + 24 * T * B * H
    transcendentals = 10 * T * B * H
    bytes_accessed = (4 * S * T * B * Din + 4 * T * B * H
                      + 4 * S * Din * G + 4 * H * G + 8 * G)

    return pl.pallas_call(
        _make_bilstm_kernel(S),
        out_shape=(jax.ShapeDtypeStruct((T, B, H), jnp.bfloat16),
                   jax.ShapeDtypeStruct((T, B, H), jnp.bfloat16)),
        grid=(NC,),
        in_specs=in_specs,
        out_specs=(pl.BlockSpec((TC, B, H), fwd_idx),
                   pl.BlockSpec((TC, B, H), bwd_idx)),
        scratch_shapes=[
            pltpu.VMEM((TC, B, G), jnp.float32),   # fwd gate pre-activations
            pltpu.VMEM((TC, B, G), jnp.float32),   # bwd gate pre-activations
            pltpu.VMEM((2, B, H), jnp.float32),    # hidden state (fwd, bwd)
            pltpu.VMEM((2, B, H), jnp.float32),    # cell state (fwd, bwd)
        ],
        compiler_params=pltpu.CompilerParams(
            dimension_semantics=("arbitrary",),
            vmem_limit_bytes=budget),
        cost_estimate=pl.CostEstimate(flops=flops, transcendentals=transcendentals,
                                      bytes_accessed=bytes_accessed),
    )(*args)


# ----------------------------------------------------------------------------
# Kernel 2: vocab head  o = x @ W + b   (x bf16, W bf16, b f32, o f32)
# Vocab axis is the OUTER grid axis so each (H, VB) weight block is fetched
# from HBM exactly once; the small activation row-blocks get re-streamed.
# ----------------------------------------------------------------------------

def _head_kernel(x_ref, w_ref, b_ref, o_ref):
    o_ref[...] = (jnp.dot(x_ref[...], w_ref[...],
                          preferred_element_type=jnp.float32) + b_ref[...])


def vocab_head(x2d, w, b):
    Np, H = x2d.shape            # Np is padded to a multiple of 8
    Vp = w.shape[1]              # Vp is padded to a multiple of 128
    budget = _vmem_limit_bytes()
    RB = _pick_block(Np, 512, _SUBLANE)
    VB = _pick_block(Vp, 2048, _LANE)

    flops = 2 * Np * H * Vp
    bytes_accessed = 2 * Np * H * (Vp // VB) + 2 * H * Vp + 4 * Np * Vp + 4 * Vp

    return pl.pallas_call(
        _head_kernel,
        out_shape=jax.ShapeDtypeStruct((Np, Vp), jnp.float32),
        grid=(Vp // VB, Np // RB),   # vocab OUTER, rows inner
        in_specs=[
            pl.BlockSpec((RB, H), lambda v, r: (r, 0)),
            pl.BlockSpec((H, VB), lambda v, r: (0, v)),
            pl.BlockSpec((1, VB), lambda v, r: (0, v)),
        ],
        out_specs=pl.BlockSpec((RB, VB), lambda v, r: (r, v)),
        compiler_params=pltpu.CompilerParams(
            dimension_semantics=("parallel", "parallel"),
            vmem_limit_bytes=budget),
        cost_estimate=pl.CostEstimate(flops=flops, transcendentals=0,
                                      bytes_accessed=bytes_accessed),
    )(x2d, w, b)


# ----------------------------------------------------------------------------
# Parameter initialization (mirrors the PyTorch module's __init__ shapes).
# ----------------------------------------------------------------------------

def _uniform(key, shape, bound, dtype=jnp.float32):
    return jax.random.uniform(key, shape, jnp.float32, -bound, bound).astype(dtype)


def _init_bilstm_stack(key, layer_dims, hidden_dim):
    bound = 1.0 / math.sqrt(hidden_dim)
    G = 4 * hidden_dim
    layers = []
    for (S, d_in) in layer_dims:
        key, k1, k2, k3, k4 = jax.random.split(key, 5)
        layers.append({
            "w_ih": _uniform(k1, (2, S, d_in, G), bound, jnp.bfloat16),
            "w_hh": _uniform(k2, (2, hidden_dim, G), bound, jnp.bfloat16),
            # combined b_ih + b_hh, kept in f32
            "b": _uniform(k3, (2, 1, G), bound) + _uniform(k4, (2, 1, G), bound),
        })
    return key, layers


def init_params(key, vocab_size, embed_dim, hidden_dim, num_layers):
    key, k_emb = jax.random.split(key)
    embedding = jax.random.normal(k_emb, (vocab_size, embed_dim), jnp.float32)
    embedding = embedding.at[0].set(0.0)                       # padding_idx=0

    dims1 = [(1, embed_dim)] + [(2, hidden_dim)] * (num_layers - 1)
    dims2 = [(2, hidden_dim)] * num_layers
    key, lstm1 = _init_bilstm_stack(key, dims1, hidden_dim)
    key, lstm2 = _init_bilstm_stack(key, dims2, hidden_dim)

    bound = 1.0 / math.sqrt(hidden_dim)
    vp = _round_up(vocab_size, _LANE)                          # lane-dense head
    key, k1, k2, k3, k4 = jax.random.split(key, 5)

    def head_w(k):
        w = _uniform(k, (hidden_dim, vocab_size), bound)
        return jnp.pad(w, ((0, 0), (0, vp - vocab_size))).astype(jnp.bfloat16)

    def head_b(k):
        bb = _uniform(k, (1, vocab_size), bound)
        return jnp.pad(bb, ((0, 0), (0, vp - vocab_size)))

    return {
        "embedding": embedding,
        "lstm1": lstm1,
        "lstm2": lstm2,
        "fw_w": head_w(k1), "fw_b": head_b(k2),
        "bw_w": head_w(k3), "bw_b": head_b(k4),
    }


# ----------------------------------------------------------------------------
# Full forward pass (= ELMoBiLM.forward)
# ----------------------------------------------------------------------------

def elmo_forward(input_ids, params):
    # TODO(synk): the nn.Embedding gather (per-token dynamic row lookup) stays
    # in plain JAX; it has no clean rectangular BlockSpec equivalent.
    emb = params["embedding"][input_ids]                       # (B, T, E) f32
    B, T, _ = emb.shape
    V = params["embedding"].shape[0]

    # One transpose to time-major for the whole stack; pad batch to 8 sublanes.
    Bp = _round_up(B, _SUBLANE)
    x = jnp.transpose(emb, (1, 0, 2)).astype(jnp.bfloat16)     # (T, B, E)
    if Bp != B:
        x = jnp.pad(x, ((0, 0), (0, Bp - B), (0, 0)))

    # lstm1 then lstm2: each nn.LSTM is itself a stack of bidirectional layers.
    sources = [x]
    for layer in params["lstm1"] + params["lstm2"]:
        out_f, out_b = bilstm_layer(sources, layer["w_ih"], layer["w_hh"], layer["b"])
        sources = [out_f, out_b]                               # "concat" via 2 sources
    out_f, out_b = sources                                     # (T, Bp, H) bf16
    H = out_f.shape[-1]

    hf = jnp.transpose(out_f, (1, 0, 2))[:B]                   # (B, T, H) bf16
    hb = jnp.transpose(out_b, (1, 0, 2))[:B]

    N = B * T
    Np = _round_up(N, _SUBLANE)

    def run_head(h_bth, w, bias):
        rows = h_bth.reshape(N, H)
        if Np != N:
            rows = jnp.pad(rows, ((0, Np - N), (0, 0)))
        logits = vocab_head(rows, w, bias)                     # (Np, Vp) f32
        return logits[:N, :V].reshape(B, T, V)

    fwd_logits = run_head(hf, params["fw_w"], params["fw_b"])
    bwd_logits = run_head(hb, params["bw_w"], params["bw_b"])

    return (fwd_logits, bwd_logits,
            (emb, hf.astype(jnp.float32), hb.astype(jnp.float32)))


# ----------------------------------------------------------------------------
# Demo
# ----------------------------------------------------------------------------

if __name__ == "__main__":
    vocab_size, embed_dim, hidden_dim, num_layers = 100, 32, 32, 2
    batch, seq_len = 2, 8

    key = jax.random.PRNGKey(0)
    key, k_ids = jax.random.split(key)
    params = init_params(key, vocab_size, embed_dim, hidden_dim, num_layers)
    input_ids = jax.random.randint(k_ids, (batch, seq_len), 0, vocab_size, jnp.int32)

    fwd_logits, bwd_logits, (emb, hf, hb) = jax.jit(elmo_forward)(input_ids, params)
    jax.block_until_ready((fwd_logits, bwd_logits, emb, hf, hb))

    assert fwd_logits.shape == (batch, seq_len, vocab_size)
    assert bwd_logits.shape == (batch, seq_len, vocab_size)
    assert emb.shape == (batch, seq_len, embed_dim)
    assert hf.shape == (batch, seq_len, hidden_dim)
    assert hb.shape == (batch, seq_len, hidden_dim)
    assert bool(jnp.all(jnp.isfinite(fwd_logits)))
    assert bool(jnp.all(jnp.isfinite(bwd_logits)))

    print("KERNEL_OK")
</pallas_src>

<mosaic_0001>
module attributes {stable_mosaic.version = 11 : i64} {
  func.func @kernel(%arg0: i32, %arg1: memref<8x8x32xbf16, #tpu.memory_space<vmem>>, %arg2: memref<8x8x32xbf16, #tpu.memory_space<vmem>>, %arg3: memref<2x1x32x128xbf16, #tpu.memory_space<vmem>>, %arg4: memref<2x32x128xbf16, #tpu.memory_space<vmem>>, %arg5: memref<2x1x128xf32, #tpu.memory_space<vmem>>, %arg6: memref<8x8x32xbf16, #tpu.memory_space<vmem>>, %arg7: memref<8x8x32xbf16, #tpu.memory_space<vmem>>, %arg8: memref<8x8x128xf32, #tpu.memory_space<vmem>>, %arg9: memref<8x8x128xf32, #tpu.memory_space<vmem>>, %arg10: memref<2x8x32xf32, #tpu.memory_space<vmem>>, %arg11: memref<2x8x32xf32, #tpu.memory_space<vmem>>) attributes {dimension_semantics = [#tpu.dimension_semantics<arbitrary>], iteration_bounds = array<i64: 1>, scalar_prefetch = 0 : i64, scratch_operands = 4 : i64, tpu.core_type = #tpu.core_type<tc>, window_params = [{transform_indices = @transform_0, window_bounds = array<i64: 8, 8, 32>}, {transform_indices = @transform_1, window_bounds = array<i64: 8, 8, 32>}, {pipeline_mode = #tpu.pipeline_mode<synchronous>, transform_indices = @transform_2, window_bounds = array<i64: 2, 1, 32, 128>}, {pipeline_mode = #tpu.pipeline_mode<synchronous>, transform_indices = @transform_3, window_bounds = array<i64: 2, 32, 128>}, {pipeline_mode = #tpu.pipeline_mode<synchronous>, transform_indices = @transform_4, window_bounds = array<i64: 2, 1, 128>}, {transform_indices = @transform_5, window_bounds = array<i64: 8, 8, 32>}, {transform_indices = @transform_6, window_bounds = array<i64: 8, 8, 32>}]} {
    %c0_i32 = arith.constant 0 : i32
    %0 = arith.cmpi eq, %arg0, %c0_i32 : i32
    %1 = arith.extui %0 : i1 to i32
    %c0_i32_0 = arith.constant 0 : i32
    %2 = arith.cmpi ne, %1, %c0_i32_0 : i32
    scf.if %2 {
      %cst_34 = arith.constant 0.000000e+00 : f32
      %30 = vector.broadcast %cst_34 : f32 to vector<2x8x32xf32>
      %c0_35 = arith.constant 0 : index
      %c0_36 = arith.constant 0 : index
      %c0_37 = arith.constant 0 : index
      %31 = vector.load %arg10[%c0_35, %c0_36, %c0_37] : memref<2x8x32xf32, #tpu.memory_space<vmem>>, vector<2x8x32xf32>
      tpu.vector_store %arg10[%c0_35, %c0_36, %c0_37], %30 {strides = array<i32>} : memref<2x8x32xf32, #tpu.memory_space<vmem>>, vector<2x8x32xf32>,
      %cst_38 = arith.constant 0.000000e+00 : f32
      %32 = vector.broadcast %cst_38 : f32 to vector<2x8x32xf32>
      %c0_39 = arith.constant 0 : index
      %c0_40 = arith.constant 0 : index
      %c0_41 = arith.constant 0 : index
      %33 = vector.load %arg11[%c0_39, %c0_40, %c0_41] : memref<2x8x32xf32, #tpu.memory_space<vmem>>, vector<2x8x32xf32>
      tpu.vector_store %arg11[%c0_39, %c0_40, %c0_41], %32 {strides = array<i32>} : memref<2x8x32xf32, #tpu.memory_space<vmem>>, vector<2x8x32xf32>,
    } else {
    }
    %c0 = arith.constant 0 : index
    %c0_1 = arith.constant 0 : index
    %c0_2 = arith.constant 0 : index
    %3 = vector.load %arg1[%c0, %c0_1, %c0_2] : memref<8x8x32xbf16, #tpu.memory_space<vmem>>, vector<8x8x32xbf16>
    %4 = vector.shape_cast %3 : vector<8x8x32xbf16> to vector<64x32xbf16>
    %c0_3 = arith.constant 0 : index
    %c0_4 = arith.constant 0 : index
    %c0_5 = arith.constant 0 : index
    %5 = vector.load %arg2[%c0_3, %c0_4, %c0_5] : memref<8x8x32xbf16, #tpu.memory_space<vmem>>, vector<8x8x32xbf16>
    %6 = vector.shape_cast %5 : vector<8x8x32xbf16> to vector<64x32xbf16>
    %c0_6 = arith.constant 0 : index
    %c0_7 = arith.constant 0 : index
    %c0_8 = arith.constant 0 : index
    %c0_9 = arith.constant 0 : index
    %7 = vector.load %arg3[%c0_6, %c0_7, %c0_8, %c0_9] : memref<2x1x32x128xbf16, #tpu.memory_space<vmem>>, vector<1x1x32x128xbf16>
    %8 = vector.shape_cast %7 : vector<1x1x32x128xbf16> to vector<32x128xbf16>
    %cst = arith.constant dense<0.000000e+00> : vector<64x128xf32>
    %9 = tpu.matmul %4, %8, %cst {dimension_numbers = #tpu.dot_dimension_numbers<[1], [0], [0], [1], [0, 0, 1, 1], [], []>} : vector<64x32xbf16>, vector<32x128xbf16>, vector<64x128xf32> -> vector<64x128xf32>
    %c1 = arith.constant 1 : index
    %c0_10 = arith.constant 0 : index
    %c0_11 = arith.constant 0 : index
    %c0_12 = arith.constant 0 : index
    %10 = vector.load %arg3[%c1, %c0_10, %c0_11, %c0_12] : memref<2x1x32x128xbf16, #tpu.memory_space<vmem>>, vector<1x1x32x128xbf16>
    %11 = vector.shape_cast %10 : vector<1x1x32x128xbf16> to vector<32x128xbf16>
    %cst_13 = arith.constant dense<0.000000e+00> : vector<64x128xf32>
    %12 = tpu.matmul %6, %11, %cst_13 {dimension_numbers = #tpu.dot_dimension_numbers<[1], [0], [0], [1], [0, 0, 1, 1], [], []>} : vector<64x32xbf16>, vector<32x128xbf16>, vector<64x128xf32> -> vector<64x128xf32>
    %c0_14 = arith.constant 0 : index
    %c0_15 = arith.constant 0 : index
    %c0_16 = arith.constant 0 : index
    %13 = vector.load %arg5[%c0_14, %c0_15, %c0_16] : memref<2x1x128xf32, #tpu.memory_space<vmem>>, vector<1x1x128xf32>
    %14 = vector.shape_cast %13 : vector<1x1x128xf32> to vector<1x128xf32>
    %15 = vector.broadcast %14 : vector<1x128xf32> to vector<64x128xf32>
    %16 = arith.addf %9, %15 : vector<64x128xf32>
    %17 = vector.shape_cast %16 : vector<64x128xf32> to vector<8x8x128xf32>
    %c0_17 = arith.constant 0 : index
    %c0_18 = arith.constant 0 : index
    %c0_19 = arith.constant 0 : index
    %18 = vector.load %arg8[%c0_17, %c0_18, %c0_19] : memref<8x8x128xf32, #tpu.memory_space<vmem>>, vector<8x8x128xf32>
    tpu.vector_store %arg8[%c0_17, %c0_18, %c0_19], %17 {strides = array<i32>} : memref<8x8x128xf32, #tpu.memory_space<vmem>>, vector<8x8x128xf32>,
    %c1_20 = arith.constant 1 : index
    %c0_21 = arith.constant 0 : index
    %c0_22 = arith.constant 0 : index
    %19 = vector.load %arg5[%c1_20, %c0_21, %c0_22] : memref<2x1x128xf32, #tpu.memory_space<vmem>>, vector<1x1x128xf32>
    %20 = vector.shape_cast %19 : vector<1x1x128xf32> to vector<1x128xf32>
    %21 = vector.broadcast %20 : vector<1x128xf32> to vector<64x128xf32>
    %22 = arith.addf %12, %21 : vector<64x128xf32>
    %23 = vector.shape_cast %22 : vector<64x128xf32> to vector<8x8x128xf32>
    %c0_23 = arith.constant 0 : index
    %c0_24 = arith.constant 0 : index
    %c0_25 = arith.constant 0 : index
    %24 = vector.load %arg9[%c0_23, %c0_24, %c0_25] : memref<8x8x128xf32, #tpu.memory_space<vmem>>, vector<8x8x128xf32>
    tpu.vector_store %arg9[%c0_23, %c0_24, %c0_25], %23 {strides = array<i32>} : memref<8x8x128xf32, #tpu.memory_space<vmem>>, vector<8x8x128xf32>,
    %c0_26 = arith.constant 0 : index
    %c0_27 = arith.constant 0 : index
    %c0_28 = arith.constant 0 : index
    %25 = vector.load %arg4[%c0_26, %c0_27, %c0_28] : memref<2x32x128xbf16, #tpu.memory_space<vmem>>, vector<1x32x128xbf16>
    %26 = vector.shape_cast %25 : vector<1x32x128xbf16> to vector<32x128xbf16>
    %c1_29 = arith.constant 1 : index
    %c0_30 = arith.constant 0 : index
    %c0_31 = arith.constant 0 : index
    %27 = vector.load %arg4[%c1_29, %c0_30, %c0_31] : memref<2x32x128xbf16, #tpu.memory_space<vmem>>, vector<1x32x128xbf16>
    %28 = vector.shape_cast %27 : vector<1x32x128xbf16> to vector<32x128xbf16>
    %c0_i32_32 = arith.constant 0 : i32
    %c8_i32 = arith.constant 8 : i32
    %29 = arith.addi %c0_i32_32, %c8_i32 : i32
    %c1_i32 = arith.constant 1 : i32
    scf.for %arg12 = %c0_i32_32 to %29 step %c1_i32  : i32 {
      %c7_i32 = arith.constant 7 : i32
      %30 = arith.subi %c7_i32, %arg12 : i32
      %31 = arith.index_cast %arg12 : i32 to index
      %c0_34 = arith.constant 0 : index
      %c0_35 = arith.constant 0 : index
      %32 = vector.load %arg8[%31, %c0_34, %c0_35] : memref<8x8x128xf32, #tpu.memory_space<vmem>>, vector<1x8x128xf32>
      %33 = vector.shape_cast %32 : vector<1x8x128xf32> to vector<8x128xf32>
      %c0_36 = arith.constant 0 : index
      %c0_37 = arith.constant 0 : index
      %c0_38 = arith.constant 0 : index
      %34 = vector.load %arg10[%c0_36, %c0_37, %c0_38] : memref<2x8x32xf32, #tpu.memory_space<vmem>>, vector<1x8x32xf32>
      %35 = vector.shape_cast %34 : vector<1x8x32xf32> to vector<8x32xf32>
      %36 = arith.truncf %35 : vector<8x32xf32> to vector<8x32xbf16>
      %cst_39 = arith.constant dense<0.000000e+00> : vector<8x128xf32>
      %37 = tpu.matmul %36, %26, %cst_39 {dimension_numbers = #tpu.dot_dimension_numbers<[1], [0], [0], [1], [0, 0, 1, 1], [], []>} : vector<8x32xbf16>, vector<32x128xbf16>, vector<8x128xf32> -> vector<8x128xf32>
      %38 = arith.addf %33, %37 : vector<8x128xf32>
      %39 = arith.index_cast %30 : i32 to index
      %c0_40 = arith.constant 0 : index
      %c0_41 = arith.constant 0 : index
      %40 = vector.load %arg9[%39, %c0_40, %c0_41] : memref<8x8x128xf32, #tpu.memory_space<vmem>>, vector<1x8x128xf32>
      %41 = vector.shape_cast %40 : vector<1x8x128xf32> to vector<8x128xf32>
      %c1_42 = arith.constant 1 : index
      %c0_43 = arith.constant 0 : index
      %c0_44 = arith.constant 0 : index
      %42 = vector.load %arg10[%c1_42, %c0_43, %c0_44] : memref<2x8x32xf32, #tpu.memory_space<vmem>>, vector<1x8x32xf32>
      %43 = vector.shape_cast %42 : vector<1x8x32xf32> to vector<8x32xf32>
      %44 = arith.truncf %43 : vector<8x32xf32> to vector<8x32xbf16>
      %cst_45 = arith.constant dense<0.000000e+00> : vector<8x128xf32>
      %45 = tpu.matmul %44, %28, %cst_45 {dimension_numbers = #tpu.dot_dimension_numbers<[1], [0], [0], [1], [0, 0, 1, 1], [], []>} : vector<8x32xbf16>, vector<32x128xbf16>, vector<8x128xf32> -> vector<8x128xf32>
      %46 = arith.addf %41, %45 : vector<8x128xf32>
      %c0_46 = arith.constant 0 : index
      %c0_47 = arith.constant 0 : index
      %c0_48 = arith.constant 0 : index
      %47 = vector.load %arg11[%c0_46, %c0_47, %c0_48] : memref<2x8x32xf32, #tpu.memory_space<vmem>>, vector<1x8x32xf32>
      %48 = vector.shape_cast %47 : vector<1x8x32xf32> to vector<8x32xf32>
      %49 = vector.extract_strided_slice %38 {offsets = [0, 0], sizes = [8, 32], strides = [1, 1]} : vector<8x128xf32> to vector<8x32xf32>
      %cst_49 = arith.constant 5.000000e-01 : f32
      %50 = vector.broadcast %cst_49 : f32 to vector<8x32xf32>
      %51 = arith.mulf %50, %49 : vector<8x32xf32>
      %52 = math.tanh %51 : vector<8x32xf32>
      %cst_50 = arith.constant 5.000000e-01 : f32
      %53 = vector.broadcast %cst_50 : f32 to vector<8x32xf32>
      %54 = arith.mulf %53, %52 : vector<8x32xf32>
      %cst_51 = arith.constant 5.000000e-01 : f32
      %55 = vector.broadcast %cst_51 : f32 to vector<8x32xf32>
      %56 = arith.addf %54, %55 : vector<8x32xf32>
      %57 = vector.extract_strided_slice %38 {offsets = [0, 32], sizes = [8, 32], strides = [1, 1]} : vector<8x128xf32> to vector<8x32xf32>
      %cst_52 = arith.constant 5.000000e-01 : f32
      %58 = vector.broadcast %cst_52 : f32 to vector<8x32xf32>
      %59 = arith.mulf %58, %57 : vector<8x32xf32>
      %60 = math.tanh %59 : vector<8x32xf32>
      %cst_53 = arith.constant 5.000000e-01 : f32
      %61 = vector.broadcast %cst_53 : f32 to vector<8x32xf32>
      %62 = arith.mulf %61, %60 : vector<8x32xf32>
      %cst_54 = arith.constant 5.000000e-01 : f32
      %63 = vector.broadcast %cst_54 : f32 to vector<8x32xf32>
      %64 = arith.addf %62, %63 : vector<8x32xf32>
      %65 = vector.extract_strided_slice %38 {offsets = [0, 64], sizes = [8, 32], strides = [1, 1]} : vector<8x128xf32> to vector<8x32xf32>
      %66 = math.tanh %65 : vector<8x32xf32>
      %67 = vector.extract_strided_slice %38 {offsets = [0, 96], sizes = [8, 32], strides = [1, 1]} : vector<8x128xf32> to vector<8x32xf32>
      %cst_55 = arith.constant 5.000000e-01 : f32
      %68 = vector.broadcast %cst_55 : f32 to vector<8x32xf32>
      %69 = arith.mulf %68, %67 : vector<8x32xf32>
      %70 = math.tanh %69 : vector<8x32xf32>
      %cst_56 = arith.constant 5.000000e-01 : f32
      %71 = vector.broadcast %cst_56 : f32 to vector<8x32xf32>
      %72 = arith.mulf %71, %70 : vector<8x32xf32>
      %cst_57 = arith.constant 5.000000e-01 : f32
      %73 = vector.broadcast %cst_57 : f32 to vector<8x32xf32>
      %74 = arith.addf %72, %73 : vector<8x32xf32>
      %75 = arith.mulf %64, %48 : vector<8x32xf32>
      %76 = arith.mulf %56, %66 : vector<8x32xf32>
      %77 = arith.addf %75, %76 : vector<8x32xf32>
      %78 = math.tanh %77 : vector<8x32xf32>
      %79 = arith.mulf %74, %78 : vector<8x32xf32>
      %c1_58 = arith.constant 1 : index
      %c0_59 = arith.constant 0 : index
      %c0_60 = arith.constant 0 : index
      %80 = vector.load %arg11[%c1_58, %c0_59, %c0_60] : memref<2x8x32xf32, #tpu.memory_space<vmem>>, vector<1x8x32xf32>
      %81 = vector.shape_cast %80 : vector<1x8x32xf32> to vector<8x32xf32>
      %82 = vector.extract_strided_slice %46 {offsets = [0, 0], sizes = [8, 32], strides = [1, 1]} : vector<8x128xf32> to vector<8x32xf32>
      %cst_61 = arith.constant 5.000000e-01 : f32
      %83 = vector.broadcast %cst_61 : f32 to vector<8x32xf32>
      %84 = arith.mulf %83, %82 : vector<8x32xf32>
      %85 = math.tanh %84 : vector<8x32xf32>
      %cst_62 = arith.constant 5.000000e-01 : f32
      %86 = vector.broadcast %cst_62 : f32 to vector<8x32xf32>
      %87 = arith.mulf %86, %85 : vector<8x32xf32>
      %cst_63 = arith.constant 5.000000e-01 : f32
      %88 = vector.broadcast %cst_63 : f32 to vector<8x32xf32>
      %89 = arith.addf %87, %88 : vector<8x32xf32>
      %90 = vector.extract_strided_slice %46 {offsets = [0, 32], sizes = [8, 32], strides = [1, 1]} : vector<8x128xf32> to vector<8x32xf32>
      %cst_64 = arith.constant 5.000000e-01 : f32
      %91 = vector.broadcast %cst_64 : f32 to vector<8x32xf32>
      %92 = arith.mulf %91, %90 : vector<8x32xf32>
      %93 = math.tanh %92 : vector<8x32xf32>
      %cst_65 = arith.constant 5.000000e-01 : f32
      %94 = vector.broadcast %cst_65 : f32 to vector<8x32xf32>
      %95 = arith.mulf %94, %93 : vector<8x32xf32>
      %cst_66 = arith.constant 5.000000e-01 : f32
      %96 = vector.broadcast %cst_66 : f32 to vector<8x32xf32>
      %97 = arith.addf %95, %96 : vector<8x32xf32>
      %98 = vector.extract_strided_slice %46 {offsets = [0, 64], sizes = [8, 32], strides = [1, 1]} : vector<8x128xf32> to vector<8x32xf32>
      %99 = math.tanh %98 : vector<8x32xf32>
      %100 = vector.extract_strided_slice %46 {offsets = [0, 96], sizes = [8, 32], strides = [1, 1]} : vector<8x128xf32> to vector<8x32xf32>
      %cst_67 = arith.constant 5.000000e-01 : f32
      %101 = vector.broadcast %cst_67 : f32 to vector<8x32xf32>
      %102 = arith.mulf %101, %100 : vector<8x32xf32>
      %103 = math.tanh %102 : vector<8x32xf32>
      %cst_68 = arith.constant 5.000000e-01 : f32
      %104 = vector.broadcast %cst_68 : f32 to vector<8x32xf32>
      %105 = arith.mulf %104, %103 : vector<8x32xf32>
      %cst_69 = arith.constant 5.000000e-01 : f32
      %106 = vector.broadcast %cst_69 : f32 to vector<8x32xf32>
      %107 = arith.addf %105, %106 : vector<8x32xf32>
      %108 = arith.mulf %97, %81 : vector<8x32xf32>
      %109 = arith.mulf %89, %99 : vector<8x32xf32>
      %110 = arith.addf %108, %109 : vector<8x32xf32>
      %111 = math.tanh %110 : vector<8x32xf32>
      %112 = arith.mulf %107, %111 : vector<8x32xf32>
      %c0_70 = arith.constant 0 : index
      %c0_71 = arith.constant 0 : index
      %c0_72 = arith.constant 0 : index
      %113 = vector.load %arg10[%c0_70, %c0_71, %c0_72] : memref<2x8x32xf32, #tpu.memory_space<vmem>>, vector<1x8x32xf32>
      %114 = vector.shape_cast %113 : vector<1x8x32xf32> to vector<8x32xf32>
      %115 = vector.shape_cast %79 : vector<8x32xf32> to vector<1x8x32xf32>
      tpu.vector_store %arg10[%c0_70, %c0_71, %c0_72], %115 {strides = array<i32>} : memref<2x8x32xf32, #tpu.memory_space<vmem>>, vector<1x8x32xf32>,
      %c0_73 = arith.constant 0 : index
      %c0_74 = arith.constant 0 : index
      %c0_75 = arith.constant 0 : index
      %116 = vector.load %arg11[%c0_73, %c0_74, %c0_75] : memref<2x8x32xf32, #tpu.memory_space<vmem>>, vector<1x8x32xf32>
      %117 = vector.shape_cast %116 : vector<1x8x32xf32> to vector<8x32xf32>
      %118 = vector.shape_cast %77 : vector<8x32xf32> to vector<1x8x32xf32>
      tpu.vector_store %arg11[%c0_73, %c0_74, %c0_75], %118 {strides = array<i32>} : memref<2x8x32xf32, #tpu.memory_space<vmem>>, vector<1x8x32xf32>,
      %c1_76 = arith.constant 1 : index
      %c0_77 = arith.constant 0 : index
      %c0_78 = arith.constant 0 : index
      %119 = vector.load %arg10[%c1_76, %c0_77, %c0_78] : memref<2x8x32xf32, #tpu.memory_space<vmem>>, vector<1x8x32xf32>
      %120 = vector.shape_cast %119 : vector<1x8x32xf32> to vector<8x32xf32>
      %121 = vector.shape_cast %112 : vector<8x32xf32> to vector<1x8x32xf32>
      tpu.vector_store %arg10[%c1_76, %c0_77, %c0_78], %121 {strides = array<i32>} : memref<2x8x32xf32, #tpu.memory_space<vmem>>, vector<1x8x32xf32>,
      %c1_79 = arith.constant 1 : index
      %c0_80 = arith.constant 0 : index
      %c0_81 = arith.constant 0 : index
      %122 = vector.load %arg11[%c1_79, %c0_80, %c0_81] : memref<2x8x32xf32, #tpu.memory_space<vmem>>, vector<1x8x32xf32>
      %123 = vector.shape_cast %122 : vector<1x8x32xf32> to vector<8x32xf32>
      %124 = vector.shape_cast %110 : vector<8x32xf32> to vector<1x8x32xf32>
      tpu.vector_store %arg11[%c1_79, %c0_80, %c0_81], %124 {strides = array<i32>} : memref<2x8x32xf32, #tpu.memory_space<vmem>>, vector<1x8x32xf32>,
      %125 = arith.truncf %79 : vector<8x32xf32> to vector<8x32xbf16>
      %126 = arith.index_cast %arg12 : i32 to index
      %c0_82 = arith.constant 0 : index
      %c0_83 = arith.constant 0 : index
      %127 = vector.load %arg6[%126, %c0_82, %c0_83] : memref<8x8x32xbf16, #tpu.memory_space<vmem>>, vector<1x8x32xbf16>
      %128 = vector.shape_cast %127 : vector<1x8x32xbf16> to vector<8x32xbf16>
      %129 = vector.shape_cast %125 : vector<8x32xbf16> to vector<1x8x32xbf16>
      tpu.vector_store %arg6[%126, %c0_82, %c0_83], %129 {strides = array<i32>} : memref<8x8x32xbf16, #tpu.memory_space<vmem>>, vector<1x8x32xbf16>,
      %130 = arith.truncf %112 : vector<8x32xf32> to vector<8x32xbf16>
      %131 = arith.index_cast %30 : i32 to index
      %c0_84 = arith.constant 0 : index
      %c0_85 = arith.constant 0 : index
      %132 = vector.load %arg7[%131, %c0_84, %c0_85] : memref<8x8x32xbf16, #tpu.memory_space<vmem>>, vector<1x8x32xbf16>
      %133 = vector.shape_cast %132 : vector<1x8x32xbf16> to vector<8x32xbf16>
      %134 = vector.shape_cast %130 : vector<8x32xbf16> to vector<1x8x32xbf16>
      tpu.vector_store %arg7[%131, %c0_84, %c0_85], %134 {strides = array<i32>} : memref<8x8x32xbf16, #tpu.memory_space<vmem>>, vector<1x8x32xbf16>,
    }
    %c8_i32_33 = arith.constant 8 : i32
    return
  }
  func.func @transform_0(%arg0: i32) -> (i32, i32, i32) {
    %c0_i32 = arith.constant 0 : i32
    %c0_i32_0 = arith.constant 0 : i32
    %c0_i32_1 = arith.constant 0 : i32
    return %arg0, %c0_i32, %c0_i32_0 : i32, i32, i32
  }
  func.func @transform_1(%arg0: i32) -> (i32, i32, i32) {
    %c0_i32 = arith.constant 0 : i32
    %0 = arith.subi %c0_i32, %arg0 : i32
    %c0_i32_0 = arith.constant 0 : i32
    %c0_i32_1 = arith.constant 0 : i32
    %c0_i32_2 = arith.constant 0 : i32
    return %0, %c0_i32_0, %c0_i32_1 : i32, i32, i32
  }
  func.func @transform_2(%arg0: i32) -> (i32, i32, i32, i32) {
    %c0_i32 = arith.constant 0 : i32
    %c0_i32_0 = arith.constant 0 : i32
    %c0_i32_1 = arith.constant 0 : i32
    %c0_i32_2 = arith.constant 0 : i32
    %c0_i32_3 = arith.constant 0 : i32
    return %c0_i32, %c0_i32_0, %c0_i32_1, %c0_i32_2 : i32, i32, i32, i32
  }
  func.func @transform_3(%arg0: i32) -> (i32, i32, i32) {
    %c0_i32 = arith.constant 0 : i32
    %c0_i32_0 = arith.constant 0 : i32
    %c0_i32_1 = arith.constant 0 : i32
    %c0_i32_2 = arith.constant 0 : i32
    return %c0_i32, %c0_i32_0, %c0_i32_1 : i32, i32, i32
  }
  func.func @transform_4(%arg0: i32) -> (i32, i32, i32) {
    %c0_i32 = arith.constant 0 : i32
    %c0_i32_0 = arith.constant 0 : i32
    %c0_i32_1 = arith.constant 0 : i32
    %c0_i32_2 = arith.constant 0 : i32
    return %c0_i32, %c0_i32_0, %c0_i32_1 : i32, i32, i32
  }
  func.func @transform_5(%arg0: i32) -> (i32, i32, i32) {
    %c0_i32 = arith.constant 0 : i32
    %c0_i32_0 = arith.constant 0 : i32
    %c0_i32_1 = arith.constant 0 : i32
    return %arg0, %c0_i32, %c0_i32_0 : i32, i32, i32
  }
  func.func @transform_6(%arg0: i32) -> (i32, i32, i32) {
    %c0_i32 = arith.constant 0 : i32
    %0 = arith.subi %c0_i32, %arg0 : i32
    %c0_i32_0 = arith.constant 0 : i32
    %c0_i32_1 = arith.constant 0 : i32
    %c0_i32_2 = arith.constant 0 : i32
    return %0, %c0_i32_0, %c0_i32_1 : i32, i32, i32
  }
}

module attributes {stable_mosaic.version = 11 : i64} {
  func.func @_head_kernel(%arg0: i32, %arg1: i32, %arg2: memref<16x32xbf16, #tpu.memory_space<vmem>>, %arg3: memref<32x128xbf16, #tpu.memory_space<vmem>>, %arg4: memref<1x128xf32, #tpu.memory_space<vmem>>, %arg5: memref<16x128xf32, #tpu.memory_space<vmem>>) attributes {dimension_semantics = [#tpu.dimension_semantics<parallel>, #tpu.dimension_semantics<parallel>], iteration_bounds = array<i64: 1, 1>, scalar_prefetch = 0 : i64, scratch_operands = 0 : i64, tpu.core_type = #tpu.core_type<tc>, window_params = [{transform_indices = @transform_0, window_bounds = array<i64: 16, 32>}, {transform_indices = @transform_1, window_bounds = array<i64: 32, 128>}, {transform_indices = @transform_2, window_bounds = array<i64: 1, 128>}, {transform_indices = @transform_3, window_bounds = array<i64: 16, 128>}]} {
    %c0 = arith.constant 0 : index
    %c0_0 = arith.constant 0 : index
    %0 = vector.load %arg2[%c0, %c0_0] : memref<16x32xbf16, #tpu.memory_space<vmem>>, vector<16x32xbf16>
    %c0_1 = arith.constant 0 : index
    %c0_2 = arith.constant 0 : index
    %1 = vector.load %arg3[%c0_1, %c0_2] : memref<32x128xbf16, #tpu.memory_space<vmem>>, vector<32x128xbf16>
    %cst = arith.constant dense<0.000000e+00> : vector<16x128xf32>
    %2 = tpu.matmul %0, %1, %cst {dimension_numbers = #tpu.dot_dimension_numbers<[1], [0], [0], [1], [0, 0, 1, 1], [], []>} : vector<16x32xbf16>, vector<32x128xbf16>, vector<16x128xf32> -> vector<16x128xf32>
    %c0_3 = arith.constant 0 : index
    %c0_4 = arith.constant 0 : index
    %3 = vector.load %arg4[%c0_3, %c0_4] : memref<1x128xf32, #tpu.memory_space<vmem>>, vector<1x128xf32>
    %4 = vector.broadcast %3 : vector<1x128xf32> to vector<16x128xf32>
    %5 = arith.addf %2, %4 : vector<16x128xf32>
    %c0_5 = arith.constant 0 : index
    %c0_6 = arith.constant 0 : index
    %6 = vector.load %arg5[%c0_5, %c0_6] : memref<16x128xf32, #tpu.memory_space<vmem>>, vector<16x128xf32>
    tpu.vector_store %arg5[%c0_5, %c0_6], %5 {strides = array<i32>} : memref<16x128xf32, #tpu.memory_space<vmem>>, vector<16x128xf32>,
    return
  }
  func.func @transform_0(%arg0: i32, %arg1: i32) -> (i32, i32) {
    %c0_i32 = arith.constant 0 : i32
    %c0_i32_0 = arith.constant 0 : i32
    return %arg1, %c0_i32 : i32, i32
  }
  func.func @transform_1(%arg0: i32, %arg1: i32) -> (i32, i32) {
    %c0_i32 = arith.constant 0 : i32
    %c0_i32_0 = arith.constant 0 : i32
    return %c0_i32, %arg0 : i32, i32
  }
  func.func @transform_2(%arg0: i32, %arg1: i32) -> (i32, i32) {
    %c0_i32 = arith.constant 0 : i32
    %c0_i32_0 = arith.constant 0 : i32
    return %c0_i32, %arg0 : i32, i32
  }
  func.func @transform_3(%arg0: i32, %arg1: i32) -> (i32, i32) {
    %c0_i32 = arith.constant 0 : i32
    return %arg1, %arg0 : i32, i32
  }
}

module attributes {stable_mosaic.version = 11 : i64} {
  func.func @kernel(%arg0: i32, %arg1: memref<8x8x32xbf16, #tpu.memory_space<vmem>>, %arg2: memref<8x8x32xbf16, #tpu.memory_space<vmem>>, %arg3: memref<8x8x32xbf16, #tpu.memory_space<vmem>>, %arg4: memref<8x8x32xbf16, #tpu.memory_space<vmem>>, %arg5: memref<2x2x32x128xbf16, #tpu.memory_space<vmem>>, %arg6: memref<2x32x128xbf16, #tpu.memory_space<vmem>>, %arg7: memref<2x1x128xf32, #tpu.memory_space<vmem>>, %arg8: memref<8x8x32xbf16, #tpu.memory_space<vmem>>, %arg9: memref<8x8x32xbf16, #tpu.memory_space<vmem>>, %arg10: memref<8x8x128xf32, #tpu.memory_space<vmem>>, %arg11: memref<8x8x128xf32, #tpu.memory_space<vmem>>, %arg12: memref<2x8x32xf32, #tpu.memory_space<vmem>>, %arg13: memref<2x8x32xf32, #tpu.memory_space<vmem>>) attributes {dimension_semantics = [#tpu.dimension_semantics<arbitrary>], iteration_bounds = array<i64: 1>, scalar_prefetch = 0 : i64, scratch_operands = 4 : i64, tpu.core_type = #tpu.core_type<tc>, window_params = [{transform_indices = @transform_0, window_bounds = array<i64: 8, 8, 32>}, {transform_indices = @transform_1, window_bounds = array<i64: 8, 8, 32>}, {transform_indices = @transform_2, window_bounds = array<i64: 8, 8, 32>}, {transform_indices = @transform_3, window_bounds = array<i64: 8, 8, 32>}, {pipeline_mode = #tpu.pipeline_mode<synchronous>, transform_indices = @transform_4, window_bounds = array<i64: 2, 2, 32, 128>}, {pipeline_mode = #tpu.pipeline_mode<synchronous>, transform_indices = @transform_5, window_bounds = array<i64: 2, 32, 128>}, {pipeline_mode = #tpu.pipeline_mode<synchronous>, transform_indices = @transform_6, window_bounds = array<i64: 2, 1, 128>}, {transform_indices = @transform_7, window_bounds = array<i64: 8, 8, 32>}, {transform_indices = @transform_8, window_bounds = array<i64: 8, 8, 32>}]} {
    %c0_i32 = arith.constant 0 : i32
    %0 = arith.cmpi eq, %arg0, %c0_i32 : i32
    %1 = arith.extui %0 : i1 to i32
    %c0_i32_0 = arith.constant 0 : i32
    %2 = arith.cmpi ne, %1, %c0_i32_0 : i32
    scf.if %2 {
      %cst_50 = arith.constant 0.000000e+00 : f32
      %42 = vector.broadcast %cst_50 : f32 to vector<2x8x32xf32>
      %c0_51 = arith.constant 0 : index
      %c0_52 = arith.constant 0 : index
      %c0_53 = arith.constant 0 : index
      %43 = vector.load %arg12[%c0_51, %c0_52, %c0_53] : memref<2x8x32xf32, #tpu.memory_space<vmem>>, vector<2x8x32xf32>
      tpu.vector_store %arg12[%c0_51, %c0_52, %c0_53], %42 {strides = array<i32>} : memref<2x8x32xf32, #tpu.memory_space<vmem>>, vector<2x8x32xf32>,
      %cst_54 = arith.constant 0.000000e+00 : f32
      %44 = vector.broadcast %cst_54 : f32 to vector<2x8x32xf32>
      %c0_55 = arith.constant 0 : index
      %c0_56 = arith.constant 0 : index
      %c0_57 = arith.constant 0 : index
      %45 = vector.load %arg13[%c0_55, %c0_56, %c0_57] : memref<2x8x32xf32, #tpu.memory_space<vmem>>, vector<2x8x32xf32>
      tpu.vector_store %arg13[%c0_55, %c0_56, %c0_57], %44 {strides = array<i32>} : memref<2x8x32xf32, #tpu.memory_space<vmem>>, vector<2x8x32xf32>,
    } else {
    }
    %c0 = arith.constant 0 : index
    %c0_1 = arith.constant 0 : index
    %c0_2 = arith.constant 0 : index
    %3 = vector.load %arg1[%c0, %c0_1, %c0_2] : memref<8x8x32xbf16, #tpu.memory_space<vmem>>, vector<8x8x32xbf16>
    %4 = vector.shape_cast %3 : vector<8x8x32xbf16> to vector<64x32xbf16>
    %c0_3 = arith.constant 0 : index
    %c0_4 = arith.constant 0 : index
    %c0_5 = arith.constant 0 : index
    %5 = vector.load %arg2[%c0_3, %c0_4, %c0_5] : memref<8x8x32xbf16, #tpu.memory_space<vmem>>, vector<8x8x32xbf16>
    %6 = vector.shape_cast %5 : vector<8x8x32xbf16> to vector<64x32xbf16>
    %c0_6 = arith.constant 0 : index
    %c0_7 = arith.constant 0 : index
    %c0_8 = arith.constant 0 : index
    %c0_9 = arith.constant 0 : index
    %7 = vector.load %arg5[%c0_6, %c0_7, %c0_8, %c0_9] : memref<2x2x32x128xbf16, #tpu.memory_space<vmem>>, vector<1x1x32x128xbf16>
    %8 = vector.shape_cast %7 : vector<1x1x32x128xbf16> to vector<32x128xbf16>
    %cst = arith.constant dense<0.000000e+00> : vector<64x128xf32>
    %9 = tpu.matmul %4, %8, %cst {dimension_numbers = #tpu.dot_dimension_numbers<[1], [0], [0], [1], [0, 0, 1, 1], [], []>} : vector<64x32xbf16>, vector<32x128xbf16>, vector<64x128xf32> -> vector<64x128xf32>
    %c1 = arith.constant 1 : index
    %c0_10 = arith.constant 0 : index
    %c0_11 = arith.constant 0 : index
    %c0_12 = arith.constant 0 : index
    %10 = vector.load %arg5[%c1, %c0_10, %c0_11, %c0_12] : memref<2x2x32x128xbf16, #tpu.memory_space<vmem>>, vector<1x1x32x128xbf16>
    %11 = vector.shape_cast %10 : vector<1x1x32x128xbf16> to vector<32x128xbf16>
    %cst_13 = arith.constant dense<0.000000e+00> : vector<64x128xf32>
    %12 = tpu.matmul %6, %11, %cst_13 {dimension_numbers = #tpu.dot_dimension_numbers<[1], [0], [0], [1], [0, 0, 1, 1], [], []>} : vector<64x32xbf16>, vector<32x128xbf16>, vector<64x128xf32> -> vector<64x128xf32>
    %c0_14 = arith.constant 0 : index
    %c0_15 = arith.constant 0 : index
    %c0_16 = arith.constant 0 : index
    %13 = vector.load %arg3[%c0_14, %c0_15, %c0_16] : memref<8x8x32xbf16, #tpu.memory_space<vmem>>, vector<8x8x32xbf16>
    %14 = vector.shape_cast %13 : vector<8x8x32xbf16> to vector<64x32xbf16>
    %c0_17 = arith.constant 0 : index
    %c0_18 = arith.constant 0 : index
    %c0_19 = arith.constant 0 : index
    %15 = vector.load %arg4[%c0_17, %c0_18, %c0_19] : memref<8x8x32xbf16, #tpu.memory_space<vmem>>, vector<8x8x32xbf16>
    %16 = vector.shape_cast %15 : vector<8x8x32xbf16> to vector<64x32xbf16>
    %c0_20 = arith.constant 0 : index
    %c1_21 = arith.constant 1 : index
    %c0_22 = arith.constant 0 : index
    %c0_23 = arith.constant 0 : index
    %17 = vector.load %arg5[%c0_20, %c1_21, %c0_22, %c0_23] : memref<2x2x32x128xbf16, #tpu.memory_space<vmem>>, vector<1x1x32x128xbf16>
    %18 = vector.shape_cast %17 : vector<1x1x32x128xbf16> to vector<32x128xbf16>
    %cst_24 = arith.constant dense<0.000000e+00> : vector<64x128xf32>
    %19 = tpu.matmul %14, %18, %cst_24 {dimension_numbers = #tpu.dot_dimension_numbers<[1], [0], [0], [1], [0, 0, 1, 1], [], []>} : vector<64x32xbf16>, vector<32x128xbf16>, vector<64x128xf32> -> vector<64x128xf32>
    %20 = arith.addf %9, %19 : vector<64x128xf32>
    %c1_25 = arith.constant 1 : index
    %c1_26 = arith.constant 1 : index
    %c0_27 = arith.constant 0 : index
    %c0_28 = arith.constant 0 : index
    %21 = vector.load %arg5[%c1_25, %c1_26, %c0_27, %c0_28] : memref<2x2x32x128xbf16, #tpu.memory_space<vmem>>, vector<1x1x32x128xbf16>
    %22 = vector.shape_cast %21 : vector<1x1x32x128xbf16> to vector<32x128xbf16>
    %cst_29 = arith.constant dense<0.000000e+00> : vector<64x128xf32>
    %23 = tpu.matmul %16, %22, %cst_29 {dimension_numbers = #tpu.dot_dimension_numbers<[1], [0], [0], [1], [0, 0, 1, 1], [], []>} : vector<64x32xbf16>, vector<32x128xbf16>, vector<64x128xf32> -> vector<64x128xf32>
    %24 = arith.addf %12, %23 : vector<64x128xf32>
    %c0_30 = arith.constant 0 : index
    %c0_31 = arith.constant 0 : index
    %c0_32 = arith.constant 0 : index
    %25 = vector.load %arg7[%c0_30, %c0_31, %c0_32] : memref<2x1x128xf32, #tpu.memory_space<vmem>>, vector<1x1x128xf32>
    %26 = vector.shape_cast %25 : vector<1x1x128xf32> to vector<1x128xf32>
    %27 = vector.broadcast %26 : vector<1x128xf32> to vector<64x128xf32>
    %28 = arith.addf %20, %27 : vector<64x128xf32>
    %29 = vector.shape_cast %28 : vector<64x128xf32> to vector<8x8x128xf32>
    %c0_33 = arith.constant 0 : index
    %c0_34 = arith.constant 0 : index
    %c0_35 = arith.constant 0 : index
    %30 = vector.load %arg10[%c0_33, %c0_34, %c0_35] : memref<8x8x128xf32, #tpu.memory_space<vmem>>, vector<8x8x128xf32>
    tpu.vector_store %arg10[%c0_33, %c0_34, %c0_35], %29 {strides = array<i32>} : memref<8x8x128xf32, #tpu.memory_space<vmem>>, vector<8x8x128xf32>,
    %c1_36 = arith.constant 1 : index
    %c0_37 = arith.constant 0 : index
    %c0_38 = arith.constant 0 : index
    %31 = vector.load %arg7[%c1_36, %c0_37, %c0_38] : memref<2x1x128xf32, #tpu.memory_space<vmem>>, vector<1x1x128xf32>
    %32 = vector.shape_cast %31 : vector<1x1x128xf32> to vector<1x128xf32>
    %33 = vector.broadcast %32 : vector<1x128xf32> to vector<64x128xf32>
    %34 = arith.addf %24, %33 : vector<64x128xf32>
    %35 = vector.shape_cast %34 : vector<64x128xf32> to vector<8x8x128xf32>
    %c0_39 = arith.constant 0 : index
    %c0_40 = arith.constant 0 : index
    %c0_41 = arith.constant 0 : index
    %36 = vector.load %arg11[%c0_39, %c0_40, %c0_41] : memref<8x8x128xf32, #tpu.memory_space<vmem>>, vector<8x8x128xf32>
    tpu.vector_store %arg11[%c0_39, %c0_40, %c0_41], %35 {strides = array<i32>} : memref<8x8x128xf32, #tpu.memory_space<vmem>>, vector<8x8x128xf32>,
    %c0_42 = arith.constant 0 : index
    %c0_43 = arith.constant 0 : index
    %c0_44 = arith.constant 0 : index
    %37 = vector.load %arg6[%c0_42, %c0_43, %c0_44] : memref<2x32x128xbf16, #tpu.memory_space<vmem>>, vector<1x32x128xbf16>
    %38 = vector.shape_cast %37 : vector<1x32x128xbf16> to vector<32x128xbf16>
    %c1_45 = arith.constant 1 : index
    %c0_46 = arith.constant 0 : index
    %c0_47 = arith.constant 0 : index
    %39 = vector.load %arg6[%c1_45, %c0_46, %c0_47] : memref<2x32x128xbf16, #tpu.memory_space<vmem>>, vector<1x32x128xbf16>
    %40 = vector.shape_cast %39 : vector<1x32x128xbf16> to vector<32x128xbf16>
    %c0_i32_48 = arith.constant 0 : i32
    %c8_i32 = arith.constant 8 : i32
    %41 = arith.addi %c0_i32_48, %c8_i32 : i32
    %c1_i32 = arith.constant 1 : i32
    scf.for %arg14 = %c0_i32_48 to %41 step %c1_i32  : i32 {
      %c7_i32 = arith.constant 7 : i32
      %42 = arith.subi %c7_i32, %arg14 : i32
      %43 = arith.index_cast %arg14 : i32 to index
      %c0_50 = arith.constant 0 : index
      %c0_51 = arith.constant 0 : index
      %44 = vector.load %arg10[%43, %c0_50, %c0_51] : memref<8x8x128xf32, #tpu.memory_space<vmem>>, vector<1x8x128xf32>
      %45 = vector.shape_cast %44 : vector<1x8x128xf32> to vector<8x128xf32>
      %c0_52 = arith.constant 0 : index
      %c0_53 = arith.constant 0 : index
      %c0_54 = arith.constant 0 : index
      %46 = vector.load %arg12[%c0_52, %c0_53, %c0_54] : memref<2x8x32xf32, #tpu.memory_space<vmem>>, vector<1x8x32xf32>
      %47 = vector.shape_cast %46 : vector<1x8x32xf32> to vector<8x32xf32>
      %48 = arith.truncf %47 : vector<8x32xf32> to vector<8x32xbf16>
      %cst_55 = arith.constant dense<0.000000e+00> : vector<8x128xf32>
      %49 = tpu.matmul %48, %38, %cst_55 {dimension_numbers = #tpu.dot_dimension_numbers<[1], [0], [0], [1], [0, 0, 1, 1], [], []>} : vector<8x32xbf16>, vector<32x128xbf16>, vector<8x128xf32> -> vector<8x128xf32>
      %50 = arith.addf %45, %49 : vector<8x128xf32>
      %51 = arith.index_cast %42 : i32 to index
      %c0_56 = arith.constant 0 : index
      %c0_57 = arith.constant 0 : index
      %52 = vector.load %arg11[%51, %c0_56, %c0_57] : memref<8x8x128xf32, #tpu.memory_space<vmem>>, vector<1x8x128xf32>
      %53 = vector.shape_cast %52 : vector<1x8x128xf32> to vector<8x128xf32>
      %c1_58 = arith.constant 1 : index
      %c0_59 = arith.constant 0 : index
      %c0_60 = arith.constant 0 : index
      %54 = vector.load %arg12[%c1_58, %c0_59, %c0_60] : memref<2x8x32xf32, #tpu.memory_space<vmem>>, vector<1x8x32xf32>
      %55 = vector.shape_cast %54 : vector<1x8x32xf32> to vector<8x32xf32>
      %56 = arith.truncf %55 : vector<8x32xf32> to vector<8x32xbf16>
      %cst_61 = arith.constant dense<0.000000e+00> : vector<8x128xf32>
      %57 = tpu.matmul %56, %40, %cst_61 {dimension_numbers = #tpu.dot_dimension_numbers<[1], [0], [0], [1], [0, 0, 1, 1], [], []>} : vector<8x32xbf16>, vector<32x128xbf16>, vector<8x128xf32> -> vector<8x128xf32>
      %58 = arith.addf %53, %57 : vector<8x128xf32>
      %c0_62 = arith.constant 0 : index
      %c0_63 = arith.constant 0 : index
      %c0_64 = arith.constant 0 : index
      %59 = vector.load %arg13[%c0_62, %c0_63, %c0_64] : memref<2x8x32xf32, #tpu.memory_space<vmem>>, vector<1x8x32xf32>
      %60 = vector.shape_cast %59 : vector<1x8x32xf32> to vector<8x32xf32>
      %61 = vector.extract_strided_slice %50 {offsets = [0, 0], sizes = [8, 32], strides = [1, 1]} : vector<8x128xf32> to vector<8x32xf32>
      %cst_65 = arith.constant 5.000000e-01 : f32
      %62 = vector.broadcast %cst_65 : f32 to vector<8x32xf32>
      %63 = arith.mulf %62, %61 : vector<8x32xf32>
      %64 = math.tanh %63 : vector<8x32xf32>
      %cst_66 = arith.constant 5.000000e-01 : f32
      %65 = vector.broadcast %cst_66 : f32 to vector<8x32xf32>
      %66 = arith.mulf %65, %64 : vector<8x32xf32>
      %cst_67 = arith.constant 5.000000e-01 : f32
      %67 = vector.broadcast %cst_67 : f32 to vector<8x32xf32>
      %68 = arith.addf %66, %67 : vector<8x32xf32>
      %69 = vector.extract_strided_slice %50 {offsets = [0, 32], sizes = [8, 32], strides = [1, 1]} : vector<8x128xf32> to vector<8x32xf32>
      %cst_68 = arith.constant 5.000000e-01 : f32
      %70 = vector.broadcast %cst_68 : f32 to vector<8x32xf32>
      %71 = arith.mulf %70, %69 : vector<8x32xf32>
      %72 = math.tanh %71 : vector<8x32xf32>
      %cst_69 = arith.constant 5.000000e-01 : f32
      %73 = vector.broadcast %cst_69 : f32 to vector<8x32xf32>
      %74 = arith.mulf %73, %72 : vector<8x32xf32>
      %cst_70 = arith.constant 5.000000e-01 : f32
      %75 = vector.broadcast %cst_70 : f32 to vector<8x32xf32>
      %76 = arith.addf %74, %75 : vector<8x32xf32>
      %77 = vector.extract_strided_slice %50 {offsets = [0, 64], sizes = [8, 32], strides = [1, 1]} : vector<8x128xf32> to vector<8x32xf32>
      %78 = math.tanh %77 : vector<8x32xf32>
      %79 = vector.extract_strided_slice %50 {offsets = [0, 96], sizes = [8, 32], strides = [1, 1]} : vector<8x128xf32> to vector<8x32xf32>
      %cst_71 = arith.constant 5.000000e-01 : f32
      %80 = vector.broadcast %cst_71 : f32 to vector<8x32xf32>
      %81 = arith.mulf %80, %79 : vector<8x32xf32>
      %82 = math.tanh %81 : vector<8x32xf32>
      %cst_72 = arith.constant 5.000000e-01 : f32
      %83 = vector.broadcast %cst_72 : f32 to vector<8x32xf32>
      %84 = arith.mulf %83, %82 : vector<8x32xf32>
      %cst_73 = arith.constant 5.000000e-01 : f32
      %85 = vector.broadcast %cst_73 : f32 to vector<8x32xf32>
      %86 = arith.addf %84, %85 : vector<8x32xf32>
      %87 = arith.mulf %76, %60 : vector<8x32xf32>
      %88 = arith.mulf %68, %78 : vector<8x32xf32>
      %89 = arith.addf %87, %88 : vector<8x32xf32>
      %90 = math.tanh %89 : vector<8x32xf32>
      %91 = arith.mulf %86, %90 : vector<8x32xf32>
      %c1_74 = arith.constant 1 : index
      %c0_75 = arith.constant 0 : index
      %c0_76 = arith.constant 0 : index
      %92 = vector.load %arg13[%c1_74, %c0_75, %c0_76] : memref<2x8x32xf32, #tpu.memory_space<vmem>>, vector<1x8x32xf32>
      %93 = vector.shape_cast %92 : vector<1x8x32xf32> to vector<8x32xf32>
      %94 = vector.extract_strided_slice %58 {offsets = [0, 0], sizes = [8, 32], strides = [1, 1]} : vector<8x128xf32> to vector<8x32xf32>
      %cst_77 = arith.constant 5.000000e-01 : f32
      %95 = vector.broadcast %cst_77 : f32 to vector<8x32xf32>
      %96 = arith.mulf %95, %94 : vector<8x32xf32>
      %97 = math.tanh %96 : vector<8x32xf32>
      %cst_78 = arith.constant 5.000000e-01 : f32
      %98 = vector.broadcast %cst_78 : f32 to vector<8x32xf32>
      %99 = arith.mulf %98, %97 : vector<8x32xf32>
      %cst_79 = arith.constant 5.000000e-01 : f32
      %100 = vector.broadcast %cst_79 : f32 to vector<8x32xf32>
      %101 = arith.addf %99, %100 : vector<8x32xf32>
      %102 = vector.extract_strided_slice %58 {offsets = [0, 32], sizes = [8, 32], strides = [1, 1]} : vector<8x128xf32> to vector<8x32xf32>
      %cst_80 = arith.constant 5.000000e-01 : f32
      %103 = vector.broadcast %cst_80 : f32 to vector<8x32xf32>
      %104 = arith.mulf %103, %102 : vector<8x32xf32>
      %105 = math.tanh %104 : vector<8x32xf32>
      %cst_81 = arith.constant 5.000000e-01 : f32
      %106 = vector.broadcast %cst_81 : f32 to vector<8x32xf32>
      %107 = arith.mulf %106, %105 : vector<8x32xf32>
      %cst_82 = arith.constant 5.000000e-01 : f32
      %108 = vector.broadcast %cst_82 : f32 to vector<8x32xf32>
      %109 = arith.addf %107, %108 : vector<8x32xf32>
      %110 = vector.extract_strided_slice %58 {offsets = [0, 64], sizes = [8, 32], strides = [1, 1]} : vector<8x128xf32> to vector<8x32xf32>
      %111 = math.tanh %110 : vector<8x32xf32>
      %112 = vector.extract_strided_slice %58 {offsets = [0, 96], sizes = [8, 32], strides = [1, 1]} : vector<8x128xf32> to vector<8x32xf32>
      %cst_83 = arith.constant 5.000000e-01 : f32
      %113 = vector.broadcast %cst_83 : f32 to vector<8x32xf32>
      %114 = arith.mulf %113, %112 : vector<8x32xf32>
      %115 = math.tanh %114 : vector<8x32xf32>
      %cst_84 = arith.constant 5.000000e-01 : f32
      %116 = vector.broadcast %cst_84 : f32 to vector<8x32xf32>
      %117 = arith.mulf %116, %115 : vector<8x32xf32>
      %cst_85 = arith.constant 5.000000e-01 : f32
      %118 = vector.broadcast %cst_85 : f32 to vector<8x32xf32>
      %119 = arith.addf %117, %118 : vector<8x32xf32>
      %120 = arith.mulf %109, %93 : vector<8x32xf32>
      %121 = arith.mulf %101, %111 : vector<8x32xf32>
      %122 = arith.addf %120, %121 : vector<8x32xf32>
      %123 = math.tanh %122 : vector<8x32xf32>
      %124 = arith.mulf %119, %123 : vector<8x32xf32>
      %c0_86 = arith.constant 0 : index
      %c0_87 = arith.constant 0 : index
      %c0_88 = arith.constant 0 : index
      %125 = vector.load %arg12[%c0_86, %c0_87, %c0_88] : memref<2x8x32xf32, #tpu.memory_space<vmem>>, vector<1x8x32xf32>
      %126 = vector.shape_cast %125 : vector<1x8x32xf32> to vector<8x32xf32>
      %127 = vector.shape_cast %91 : vector<8x32xf32> to vector<1x8x32xf32>
      tpu.vector_store %arg12[%c0_86, %c0_87, %c0_88], %127 {strides = array<i32>} : memref<2x8x32xf32, #tpu.memory_space<vmem>>, vector<1x8x32xf32>,
      %c0_89 = arith.constant 0 : index
      %c0_90 = arith.constant 0 : index
      %c0_91 = arith.constant 0 : index
      %128 = vector.load %arg13[%c0_89, %c0_90, %c0_91] : memref<2x8x32xf32, #tpu.memory_space<vmem>>, vector<1x8x32xf32>
      %129 = vector.shape_cast %128 : vector<1x8x32xf32> to vector<8x32xf32>
      %130 = vector.shape_cast %89 : vector<8x32xf32> to vector<1x8x32xf32>
      tpu.vector_store %arg13[%c0_89, %c0_90, %c0_91], %130 {strides = array<i32>} : memref<2x8x32xf32, #tpu.memory_space<vmem>>, vector<1x8x32xf32>,
      %c1_92 = arith.constant 1 : index
      %c0_93 = arith.constant 0 : index
      %c0_94 = arith.constant 0 : index
      %131 = vector.load %arg12[%c1_92, %c0_93, %c0_94] : memref<2x8x32xf32, #tpu.memory_space<vmem>>, vector<1x8x32xf32>
      %132 = vector.shape_cast %131 : vector<1x8x32xf32> to vector<8x32xf32>
      %133 = vector.shape_cast %124 : vector<8x32xf32> to vector<1x8x32xf32>
      tpu.vector_store %arg12[%c1_92, %c0_93, %c0_94], %133 {strides = array<i32>} : memref<2x8x32xf32, #tpu.memory_space<vmem>>, vector<1x8x32xf32>,
      %c1_95 = arith.constant 1 : index
      %c0_96 = arith.constant 0 : index
      %c0_97 = arith.constant 0 : index
      %134 = vector.load %arg13[%c1_95, %c0_96, %c0_97] : memref<2x8x32xf32, #tpu.memory_space<vmem>>, vector<1x8x32xf32>
      %135 = vector.shape_cast %134 : vector<1x8x32xf32> to vector<8x32xf32>
      %136 = vector.shape_cast %122 : vector<8x32xf32> to vector<1x8x32xf32>
      tpu.vector_store %arg13[%c1_95, %c0_96, %c0_97], %136 {strides = array<i32>} : memref<2x8x32xf32, #tpu.memory_space<vmem>>, vector<1x8x32xf32>,
      %137 = arith.truncf %91 : vector<8x32xf32> to vector<8x32xbf16>
      %138 = arith.index_cast %arg14 : i32 to index
      %c0_98 = arith.constant 0 : index
      %c0_99 = arith.constant 0 : index
      %139 = vector.load %arg8[%138, %c0_98, %c0_99] : memref<8x8x32xbf16, #tpu.memory_space<vmem>>, vector<1x8x32xbf16>
      %140 = vector.shape_cast %139 : vector<1x8x32xbf16> to vector<8x32xbf16>
      %141 = vector.shape_cast %137 : vector<8x32xbf16> to vector<1x8x32xbf16>
      tpu.vector_store %arg8[%138, %c0_98, %c0_99], %141 {strides = array<i32>} : memref<8x8x32xbf16, #tpu.memory_space<vmem>>, vector<1x8x32xbf16>,
      %142 = arith.truncf %124 : vector<8x32xf32> to vector<8x32xbf16>
      %143 = arith.index_cast %42 : i32 to index
      %c0_100 = arith.constant 0 : index
      %c0_101 = arith.constant 0 : index
      %144 = vector.load %arg9[%143, %c0_100, %c0_101] : memref<8x8x32xbf16, #tpu.memory_space<vmem>>, vector<1x8x32xbf16>
      %145 = vector.shape_cast %144 : vector<1x8x32xbf16> to vector<8x32xbf16>
      %146 = vector.shape_cast %142 : vector<8x32xbf16> to vector<1x8x32xbf16>
      tpu.vector_store %arg9[%143, %c0_100, %c0_101], %146 {strides = array<i32>} : memref<8x8x32xbf16, #tpu.memory_space<vmem>>, vector<1x8x32xbf16>,
    }
    %c8_i32_49 = arith.constant 8 : i32
    return
  }
  func.func @transform_0(%arg0: i32) -> (i32, i32, i32) {
    %c0_i32 = arith.constant 0 : i32
    %c0_i32_0 = arith.constant 0 : i32
    %c0_i32_1 = arith.constant 0 : i32
    return %arg0, %c0_i32, %c0_i32_0 : i32, i32, i32
  }
  func.func @transform_1(%arg0: i32) -> (i32, i32, i32) {
    %c0_i32 = arith.constant 0 : i32
    %0 = arith.subi %c0_i32, %arg0 : i32
    %c0_i32_0 = arith.constant 0 : i32
    %c0_i32_1 = arith.constant 0 : i32
    %c0_i32_2 = arith.constant 0 : i32
    return %0, %c0_i32_0, %c0_i32_1 : i32, i32, i32
  }
  func.func @transform_2(%arg0: i32) -> (i32, i32, i32) {
    %c0_i32 = arith.constant 0 : i32
    %c0_i32_0 = arith.constant 0 : i32
    %c0_i32_1 = arith.constant 0 : i32
    return %arg0, %c0_i32, %c0_i32_0 : i32, i32, i32
  }
  func.func @transform_3(%arg0: i32) -> (i32, i32, i32) {
    %c0_i32 = arith.constant 0 : i32
    %0 = arith.subi %c0_i32, %arg0 : i32
    %c0_i32_0 = arith.constant 0 : i32
    %c0_i32_1 = arith.constant 0 : i32
    %c0_i32_2 = arith.constant 0 : i32
    return %0, %c0_i32_0, %c0_i32_1 : i32, i32, i32
  }
  func.func @transform_4(%arg0: i32) -> (i32, i32, i32, i32) {
    %c0_i32 = arith.constant 0 : i32
    %c0_i32_0 = arith.constant 0 : i32
    %c0_i32_1 = arith.constant 0 : i32
    %c0_i32_2 = arith.constant 0 : i32
    %c0_i32_3 = arith.constant 0 : i32
    return %c0_i32, %c0_i32_0, %c0_i32_1, %c0_i32_2 : i32, i32, i32, i32
  }
  func.func @transform_5(%arg0: i32) -> (i32, i32, i32) {
    %c0_i32 = arith.constant 0 : i32
    %c0_i32_0 = arith.constant 0 : i32
    %c0_i32_1 = arith.constant 0 : i32
    %c0_i32_2 = arith.constant 0 : i32
    return %c0_i32, %c0_i32_0, %c0_i32_1 : i32, i32, i32
  }
  func.func @transform_6(%arg0: i32) -> (i32, i32, i32) {
    %c0_i32 = arith.constant 0 : i32
    %c0_i32_0 = arith.constant 0 : i32
    %c0_i32_1 = arith.constant 0 : i32
    %c0_i32_2 = arith.constant 0 : i32
    return %c0_i32, %c0_i32_0, %c0_i32_1 : i32, i32, i32
  }
  func.func @transform_7(%arg0: i32) -> (i32, i32, i32) {
    %c0_i32 = arith.constant 0 : i32
    %c0_i32_0 = arith.constant 0 : i32
    %c0_i32_1 = arith.constant 0 : i32
    return %arg0, %c0_i32, %c0_i32_0 : i32, i32, i32
  }
  func.func @transform_8(%arg0: i32) -> (i32, i32, i32) {
    %c0_i32 = arith.constant 0 : i32
    %0 = arith.subi %c0_i32, %arg0 : i32
    %c0_i32_0 = arith.constant 0 : i32
    %c0_i32_1 = arith.constant 0 : i32
    %c0_i32_2 = arith.constant 0 : i32
    return %0, %c0_i32_0, %c0_i32_1 : i32, i32, i32
  }
}

</mosaic_0001>

<llo_original>
// kernel: elmo_forward.11
$region0: #{elmo_forward.11}
  #allocation0 [shape = 'u32[]', space=smem, size = 0x4, offset = 0x4, fixed_abs, tag = 'smem constant byte address 0x4 - core index']
  #allocation1 [shape = 'u32[144,128]{1,0:T(1,128)}', space=vmem, size = 0x12000, scoped, tag = 'internal scratch']
  %s0 = inlined_call_operand.hbm [shape: bf16[16,32], index: 0, kind: input, shape index: {}]
  %s1 = inlined_call_operand.hbm [shape: bf16[32,128], index: 1, kind: input, shape index: {}]
  %s2 = inlined_call_operand.hbm [shape: f32[1,128], index: 2, kind: input, shape index: {}]
  %s3 = inlined_call_operand.hbm [shape: f32[16,128], index: 3, kind: output, shape index: {}]
  %s4 = sld [smem:[#allocation0]]
  $region34: #{elmo_forward.11} parent=0
    _
  %s6 = ssub.s32 1, %s4
  %s7 = scalar_select 0, %s6, %s4
  $region1: #{elmo_forward.11} parent=0
    #allocation2 [shape = 'u8[4096]{0}', space=vmem, size = 0x1000, scoped, tag = 'input window, operand 0, single buffered']
    #allocation3 [shape = 's32[1]{0}', space=sflag, size = 0x4, scoped, tag = 'scoped memory for elmo_forward.11']
    #allocation4 [shape = 's32[1]{0}', space=sflag, size = 0x4, scoped, tag = 'scoped memory for elmo_forward.11']
    #allocation5 [shape = 'u8[8192]{0}', space=vmem, size = 0x2000, scoped, tag = 'input window, operand 1, single buffered']
    #allocation6 [shape = 's32[1]{0}', space=sflag, size = 0x4, scoped, tag = 'scoped memory for elmo_forward.11']
    #allocation7 [shape = 'u8[512]{0}', space=vmem, size = 0x400, scoped, tag = 'input window, operand 2, single buffered']
    #allocation8 [shape = 'u8[8192]{0}', space=vmem, size = 0x2000, scoped, tag = 'output window, operand 0, single buffered']
    %8 = vsyncpa [#allocation3], 0
    %9 = vsyncpa [#allocation6], 0
    %10 = vsyncpa [#allocation4], 0
    // Predicated region
    $region2: #{elmo_forward.11} parent=1 // pred_check
      _
    $region3: #{elmo_forward.11} parent=1 // pred_check_branch
      %12 = sbr.rel (0) target = $region5
    $region4: #{elmo_forward.11} parent=1 // pred_region
      %s14 = ssub.s32 128, 128
      %15 = vsyncadd [#allocation3], %s14
      %s16 = sshll.u32 [#allocation2], 4
      %s17 = int_to_ptr.vmem [resolvable:$true] %s16
      %22 = dma.hbm_to_vmem [thread:$0]  %s0, 128, %s17, [#allocation3], 64, 64, 4
    $region5: #{elmo_forward.11} parent=1 // pred_fallthru
      _
    // Predicated region
    $region6: #{elmo_forward.11} parent=1 // pred_check
      _
    $region7: #{elmo_forward.11} parent=1 // pred_check_branch
      %24 = sbr.rel (0) target = $region9
    $region8: #{elmo_forward.11} parent=1 // pred_region
      %s26 = ssub.s32 256, 256
      %27 = vsyncadd [#allocation6], %s26
      %s28 = sshll.u32 [#allocation5], 4
      %s29 = int_to_ptr.vmem [resolvable:$true] %s28
      %34 = dma.hbm_to_vmem [thread:$0]  %s1, 256, %s29, [#allocation6], 64, 64, 4
    $region9: #{elmo_forward.11} parent=1 // pred_fallthru
      _
    // Predicated region
    $region10: #{elmo_forward.11} parent=1 // pred_check
      _
    $region11: #{elmo_forward.11} parent=1 // pred_check_branch
      %36 = sbr.rel (0) target = $region13
    $region12: #{elmo_forward.11} parent=1 // pred_region
      %s38 = ssub.s32 16, 16
      %39 = vsyncadd [#allocation6], %s38
      %s41 = sshll.u32 [#allocation7], 4
      %s42 = int_to_ptr.vmem [resolvable:$true] %s41
      %44 = dma.hbm_to_vmem [thread:$0]  %s2, 16, %s42, [#allocation6]
    $region13: #{elmo_forward.11} parent=1 // pred_fallthru
      _
    // Predicated region
    $region14: #{elmo_forward.11} parent=1 // pred_check
      _
    $region15: #{elmo_forward.11} parent=1 // pred_check_branch
      %46 = sbr.rel (0) target = $region17
    $region16: #{elmo_forward.11} parent=1 // pred_region
      %47 = dma.done [#allocation3], 128
    $region17: #{elmo_forward.11} parent=1 // pred_fallthru
      _
    // Predicated region
    $region18: #{elmo_forward.11} parent=1 // pred_check
      _
    $region19: #{elmo_forward.11} parent=1 // pred_check_branch
      %49 = sbr.rel (0) target = $region21
    $region20: #{elmo_forward.11} parent=1 // pred_region
      %50 = dma.done [#allocation6], 256
    $region21: #{elmo_forward.11} parent=1 // pred_fallthru
      _
    // Predicated region
    $region22: #{elmo_forward.11} parent=1 // pred_check
      _
    $region23: #{elmo_forward.11} parent=1 // pred_check_branch
      %52 = sbr.rel (0) target = $region25
    $region24: #{elmo_forward.11} parent=1 // pred_region
      %53 = dma.done [#allocation6], 16
    $region25: #{elmo_forward.11} parent=1 // pred_fallthru
      _
    %v55 = vld [vmem:[#allocation2] sm:$0xf]
    %v56 = vld [vmem:[#allocation2 + $0x4] sm:$0xf]
    %v57 = vld [vmem:[#allocation5] sm:$0xf]
    %v58 = vld [vmem:[#allocation5 + $0x4] sm:$0xf]
    %v59 = vld [vmem:[#allocation5 + $0x8] sm:$0xf]
    %v60 = vld [vmem:[#allocation5 + $0xc] sm:$0xf]
    %v61 = vld [vmem:[#allocation7] sm:$0x1]
    %v63 = vlaneseq
    %v64 = vshrl.u32 %v63, 7
    %v65 = vsub.s32 0, %v64
    %v66 = vrot.slane %v61, %v65
    %v70 = vunpack.c.l.b16 %v55
    %v71 = vunpack.c.l.b16 %v56
    %v72 = vpack.c.b16 %v71, %v70
    %v77 = vunpack.c.l.b16 %v57
    %v78 = vunpack.c.l.b16 %v58
    %v79 = vunpack.c.l.b16 %v59
    %v80 = vunpack.c.l.b16 %v60
    %v81 = vpack.c.b16 %v78, %v77
    %v82 = vpack.c.b16 %v80, %v79
    %vm85 = vcmask 261120
    %v87 = vsel %vm85, %v72, 0
    %89 = vmatprep.subr.bf16.mxu0 0
    %90 = vmatpush1.bf16.msra.mxu0 %v81
    %91 = vmatprep.subr.bf16.mxu0 0
    %92 = vmatpush1.bf16.msra.mxu0 %v82
    %93 = vmatprep.subr.bf16.mxu0 0
    %94 = vmatpush1.bf16.msra.mxu0 0
    %95 = vmatprep.subr.bf16.mxu0 0
    %96 = vmatpush1.bf16.msra.mxu0 0
    %97 = vmatprep.subr.bf16.mxu0 0
    %98 = vmatpush1.bf16.msra.mxu0 0
    %99 = vmatprep.subr.bf16.mxu0 0
    %100 = vmatpush1.bf16.msra.mxu0 0
    %101 = vmatprep.subr.bf16.mxu0 0
    %102 = vmatpush1.bf16.msra.mxu0 0
    %103 = vmatprep.subr.bf16.mxu0 0
    %104 = vmatpush1.bf16.msra.mxu0 0
    %105 = vmatprep.subr.bf16.mxu0 0
    %106 = vmatpush1.bf16.msra.mxu0 0
    %107 = vmatprep.subr.bf16.mxu0 0
    %108 = vmatpush1.bf16.msra.mxu0 0
    %109 = vmatprep.subr.bf16.mxu0 0
    %110 = vmatpush1.bf16.msra.mxu0 0
    %111 = vmatprep.subr.bf16.mxu0 0
    %112 = vmatpush1.bf16.msra.mxu0 0
    %113 = vmatprep.subr.bf16.mxu0 0
    %114 = vmatpush1.bf16.msra.mxu0 0
    %115 = vmatprep.subr.bf16.mxu0 0
    %116 = vmatpush1.bf16.msra.mxu0 0
    %117 = vmatprep.subr.bf16.mxu0 0
    %118 = vmatpush1.bf16.msra.mxu0 0
    %119 = vmatprep.subr.bf16.mxu0 0
    %120 = vmatpush1.bf16.msra.mxu0 0
    %121 = vmatprep.mubr.bf16.mxu0 0
    %122 = vmatmul.mubr.bf16.gmra.mrb[0].mxu0 %v87
    %v123 = vpop.f32.mrb[0].mxu0
    %v124 = vadd.f32 %v66, %v123
    %v125 = vpop.f32.mrb[0].mxu0
    %v126 = vpop.f32.mrb[0].mxu0
    %v127 = vadd.f32 %v66, %v126
    %v128 = vpop.f32.mrb[0].mxu0
    %129 = vdwg.mxu0
    %130 = vst [vmem:[#allocation8] sm:$0xff] %v124
    %131 = vst [vmem:[#allocation8 + $0x8] sm:$0xff] %v127
    // Predicated region
    $region26: #{elmo_forward.11} parent=1 // pred_check
      _
    $region27: #{elmo_forward.11} parent=1 // pred_check_branch
      %133 = sbr.rel (0) target = $region29
    $region28: #{elmo_forward.11} parent=1 // pred_region
      %s135 = ssub.s32 256, 256
      %136 = vsyncadd [#allocation4], %s135
      %s137 = sshll.u32 [#allocation8], 4
      %s138 = int_to_ptr.vmem [resolvable:$true] %s137
      %143 = dma.vmem_to_hbm [thread:$0]  %s138, 256, %s3, [#allocation4], 128, 128, 8
    $region29: #{elmo_forward.11} parent=1 // pred_fallthru
      _
    // Predicated region
    $region30: #{elmo_forward.11} parent=1 // pred_check
      _
    $region31: #{elmo_forward.11} parent=1 // pred_check_branch
      %145 = sbr.rel (0) target = $region33
    $region32: #{elmo_forward.11} parent=1 // pred_region
      %146 = dma.done [#allocation4], 256
    $region33: #{elmo_forward.11} parent=1 // pred_fallthru
      _
    %147 = vsyncpa [#allocation3], 1
    %148 = vsyncpa [#allocation6], 1
    %149 = vsyncpa [#allocation4], 1

// kernel: elmo_forward.6
$region0: #{elmo_forward.6}
  #allocation0 [shape = 'u32[]', space=smem, size = 0x4, offset = 0x4, fixed_abs, tag = 'smem constant byte address 0x4 - core index']
  #allocation1 [shape = 'u32[144,128]{1,0:T(1,128)}', space=vmem, size = 0x12000, scoped, tag = 'internal scratch']
  #allocation2 [shape = 'f32[8,8,128]{2,1,0:T(8,128)}', space=vmem, size = 0x8000, scoped, tag = 'scratch operand']
  #allocation3 [shape = 'f32[8,8,128]{2,1,0:T(8,128)}', space=vmem, size = 0x8000, scoped, tag = 'scratch operand']
  #allocation4 [shape = 'f32[2,8,32]{2,1,0:T(8,128)}', space=vmem, size = 0x2000, scoped, tag = 'scratch operand']
  #allocation5 [shape = 'f32[2,8,32]{2,1,0:T(8,128)}', space=vmem, size = 0x2000, scoped, tag = 'scratch operand']
  %s0 = inlined_call_operand.hbm [shape: bf16[8,8,32], index: 0, kind: input, shape index: {}, may-alias: {0,1}]
  %s1 = inlined_call_operand.hbm [shape: bf16[8,8,32], index: 1, kind: input, shape index: {}, may-alias: {0,1}]
  %s2 = inlined_call_operand.hbm [shape: bf16[2,1,32,128], index: 2, kind: input, shape index: {}]
  %s3 = inlined_call_operand.hbm [shape: bf16[2,32,128], index: 3, kind: input, shape index: {}]
  %s4 = inlined_call_operand.hbm [shape: f32[2,1,128], index: 4, kind: input, shape index: {}]
  %s5 = inlined_call_operand.hbm [shape: bf16[8,8,32], index: 5, kind: output, shape index: {0}]
  %s6 = inlined_call_operand.hbm [shape: bf16[8,8,32], index: 6, kind: output, shape index: {1}]
  %7 = xla_tuple %s5, %s6
  %s8 = sld [smem:[#allocation0]]
  $region69: #{elmo_forward.6} parent=0
    _
  %s10 = ssub.s32 1, %s8
  %s11 = scalar_select 0, %s10, %s8
  $region1: #{elmo_forward.6} parent=0
    #allocation6 [shape = 'u8[16384]{0}', space=vmem, size = 0x4000, scoped, tag = 'input window, operand 0, single buffered']
    #allocation7 [shape = 's32[1]{0}', space=sflag, size = 0x4, scoped, tag = 'scoped memory for elmo_forward.6']
    #allocation8 [shape = 's32[1]{0}', space=sflag, size = 0x4, scoped, tag = 'scoped memory for elmo_forward.6']
    #allocation9 [shape = 'u8[16384]{0}', space=vmem, size = 0x4000, scoped, tag = 'input window, operand 1, single buffered']
    #allocation10 [shape = 's32[1]{0}', space=sflag, size = 0x4, scoped, tag = 'scoped memory for elmo_forward.6']
    #allocation11 [shape = 'u8[16384]{0}', space=vmem, size = 0x4000, scoped, tag = 'input window, operand 2, single buffered']
    #allocation12 [shape = 'u8[16384]{0}', space=vmem, size = 0x4000, scoped, tag = 'input window, operand 3, single buffered']
    #allocation13 [shape = 's32[1]{0}', space=sflag, size = 0x4, scoped, tag = 'scoped memory for elmo_forward.6']
    #allocation14 [shape = 'u8[1024]{0}', space=vmem, size = 0x400, scoped, tag = 'input window, operand 4, single buffered']
    #allocation15 [shape = 'u8[16384]{0}', space=vmem, size = 0x4000, scoped, tag = 'output window, operand 0, single buffered']
    #allocation16 [shape = 'u8[16384]{0}', space=vmem, size = 0x4000, scoped, tag = 'output window, operand 1, single buffered']
    #allocation17 [shape = 's32[1]{0}', space=sflag, size = 0x4, scoped, tag = 'scoped memory for elmo_forward.6']
    %12 = vsyncpa [#allocation7], 0
    %13 = vsyncpa [#allocation10], 0
    %14 = vsyncpa [#allocation13], 0
    %15 = vsyncpa [#allocation8], 0
    %16 = vsyncpa [#allocation17], 0
    // Predicated region
    $region2: #{elmo_forward.6} parent=1 // pred_check
      _
    $region3: #{elmo_forward.6} parent=1 // pred_check_branch
      %18 = sbr.rel (0) target = $region5
    $region4: #{elmo_forward.6} parent=1 // pred_region
      %s20 = ssub.s32 512, 512
      %21 = vsyncadd [#allocation7], %s20
      %s22 = sshll.u32 [#allocation6], 4
      %s23 = int_to_ptr.vmem [resolvable:$true] %s22
      %28 = dma.hbm_to_vmem [thread:$0]  %s0, 512, %s23, [#allocation7], 64, 64, 4
    $region5: #{elmo_forward.6} parent=1 // pred_fallthru
      _
    // Predicated region
    $region6: #{elmo_forward.6} parent=1 // pred_check
      _
    $region7: #{elmo_forward.6} parent=1 // pred_check_branch
      %30 = sbr.rel (0) target = $region9
    $region8: #{elmo_forward.6} parent=1 // pred_region
      %s31 = ssub.s32 0, 0
      %s32 = smul.u32 8, %s31
      %s34 = ssub.s32 512, 512
      %35 = vsyncadd [#allocation10], %s34
      %s36 = smul.addr %s32, 64
      %s37 = scalar_lea.hbm %s1, %s36
      %s38 = sshll.u32 [#allocation9], 4
      %s39 = int_to_ptr.vmem [resolvable:$true] %s38
      %44 = dma.hbm_to_vmem [thread:$0]  %s37, 512, %s39, [#allocation10], 64, 64, 4
    $region9: #{elmo_forward.6} parent=1 // pred_fallthru
      _
    // Predicated region
    $region10: #{elmo_forward.6} parent=1 // pred_check
      _
    $region11: #{elmo_forward.6} parent=1 // pred_check_branch
      %46 = sbr.rel (0) target = $region13
    $region12: #{elmo_forward.6} parent=1 // pred_region
      %s48 = ssub.s32 512, 512
      %49 = vsyncadd [#allocation10], %s48
      %s50 = sshll.u32 [#allocation11], 4
      %s51 = int_to_ptr.vmem [resolvable:$true] %s50
      %56 = dma.hbm_to_vmem [thread:$0]  %s2, 512, %s51, [#allocation10], 64, 64, 4
    $region13: #{elmo_forward.6} parent=1 // pred_fallthru
      _
    // Predicated region
    $region14: #{elmo_forward.6} parent=1 // pred_check
      _
    $region15: #{elmo_forward.6} parent=1 // pred_check_branch
      %58 = sbr.rel (0) target = $region17
    $region16: #{elmo_forward.6} parent=1 // pred_region
      %s60 = ssub.s32 512, 512
      %61 = vsyncadd [#allocation13], %s60
      %s62 = sshll.u32 [#allocation12], 4
      %s63 = int_to_ptr.vmem [resolvable:$true] %s62
      %68 = dma.hbm_to_vmem [thread:$0]  %s3, 512, %s63, [#allocation13], 64, 64, 4
    $region17: #{elmo_forward.6} parent=1 // pred_fallthru
      _
    // Predicated region
    $region18: #{elmo_forward.6} parent=1 // pred_check
      _
    $region19: #{elmo_forward.6} parent=1 // pred_check_branch
      %70 = sbr.rel (0) target = $region21
    $region20: #{elmo_forward.6} parent=1 // pred_region
      %s72 = ssub.s32 32, 32
      %73 = vsyncadd [#allocation13], %s72
      %s74 = sshll.u32 [#allocation14], 4
      %s75 = int_to_ptr.vmem [resolvable:$true] %s74
      %80 = dma.hbm_to_vmem [thread:$0]  %s4, 32, %s75, [#allocation13], 16, 16, 1
    $region21: #{elmo_forward.6} parent=1 // pred_fallthru
      _
    // Predicated region
    $region22: #{elmo_forward.6} parent=1 // pred_check
      _
    $region23: #{elmo_forward.6} parent=1 // pred_check_branch
      %82 = sbr.rel (0) target = $region25
    $region24: #{elmo_forward.6} parent=1 // pred_region
      %83 = dma.done [#allocation7], 512
    $region25: #{elmo_forward.6} parent=1 // pred_fallthru
      _
    // Predicated region
    $region26: #{elmo_forward.6} parent=1 // pred_check
      _
    $region27: #{elmo_forward.6} parent=1 // pred_check_branch
      %85 = sbr.rel (0) target = $region29
    $region28: #{elmo_forward.6} parent=1 // pred_region
      %86 = dma.done [#allocation10], 512
    $region29: #{elmo_forward.6} parent=1 // pred_fallthru
      _
    // Predicated region
    $region30: #{elmo_forward.6} parent=1 // pred_check
      _
    $region31: #{elmo_forward.6} parent=1 // pred_check_branch
      %88 = sbr.rel (0) target = $region33
    $region32: #{elmo_forward.6} parent=1 // pred_region
      %89 = dma.done [#allocation10], 512
    $region33: #{elmo_forward.6} parent=1 // pred_fallthru
      _
    // Predicated region
    $region34: #{elmo_forward.6} parent=1 // pred_check
      _
    $region35: #{elmo_forward.6} parent=1 // pred_check_branch
      %91 = sbr.rel (0) target = $region37
    $region36: #{elmo_forward.6} parent=1 // pred_region
      %92 = dma.done [#allocation13], 512
    $region37: #{elmo_forward.6} parent=1 // pred_fallthru
      _
    // Predicated region
    $region38: #{elmo_forward.6} parent=1 // pred_check
      _
    $region39: #{elmo_forward.6} parent=1 // pred_check_branch
      %94 = sbr.rel (0) target = $region41
    $region40: #{elmo_forward.6} parent=1 // pred_region
      %95 = dma.done [#allocation13], 32
    $region41: #{elmo_forward.6} parent=1 // pred_fallthru
      _
    %s96 = ssub.s32 0, 0
    %s97 = smul.u32 8, %s96
    %s98 = ssub.s32 0, 0
    %s99 = smul.u32 8, %s98
    %p101 = scmp.eq.s32.totalorder 0, 0
    // Predicated region
    $region42: #{elmo_forward.6} parent=1 // pred_check
      %p102 = pneg %p101
    $region43: #{elmo_forward.6} parent=1 // pred_check_branch
      %104 = sbr.rel (%p102) target = $region45
    $region44: #{elmo_forward.6} parent=1 // pred_region
      %vm105 = vcmask 261120
      %106 = vst.msk [vmem:[#allocation4] sm:$0xff] %vm105, 0.0
      %107 = vst.msk [vmem:[#allocation4 + $0x8] sm:$0xff] %vm105, 0.0
      %108 = vst.msk [vmem:[#allocation5] sm:$0xff] %vm105, 0.0
      %109 = vst.msk [vmem:[#allocation5 + $0x8] sm:$0xff] %vm105, 0.0
    $region45: #{elmo_forward.6} parent=1 // pred_fallthru
      _
    %v110 = vld [vmem:[#allocation6] sm:$0xf]
    %v111 = vld [vmem:[#allocation6 + $0x4] sm:$0xf]
    %v112 = vld [vmem:[#allocation6 + $0x8] sm:$0xf]
    %v113 = vld [vmem:[#allocation6 + $0xc] sm:$0xf]
    %v114 = vld [vmem:[#allocation6 + $0x10] sm:$0xf]
    %v115 = vld [vmem:[#allocation6 + $0x14] sm:$0xf]
    %v116 = vld [vmem:[#allocation6 + $0x18] sm:$0xf]
    %v117 = vld [vmem:[#allocation6 + $0x1c] sm:$0xf]
    %v118 = vld [vmem:[#allocation9] sm:$0xf]
    %v119 = vld [vmem:[#allocation9 + $0x4] sm:$0xf]
    %v120 = vld [vmem:[#allocation9 + $0x8] sm:$0xf]
    %v121 = vld [vmem:[#allocation9 + $0xc] sm:$0xf]
    %v122 = vld [vmem:[#allocation9 + $0x10] sm:$0xf]
    %v123 = vld [vmem:[#allocation9 + $0x14] sm:$0xf]
    %v124 = vld [vmem:[#allocation9 + $0x18] sm:$0xf]
    %v125 = vld [vmem:[#allocation9 + $0x1c] sm:$0xf]
    %v126 = vld [vmem:[#allocation11] sm:$0xf]
    %v127 = vld [vmem:[#allocation11 + $0x4] sm:$0xf]
    %v128 = vld [vmem:[#allocation11 + $0x8] sm:$0xf]
    %v129 = vld [vmem:[#allocation11 + $0xc] sm:$0xf]
    %s130 = scalar_lea.vmem [#allocation11], 16
    %v131 = vld [vmem:[%s130] sm:$0xf]
    %v132 = vld [vmem:[%s130 + $0x4] sm:$0xf]
    %v133 = vld [vmem:[%s130 + $0x8] sm:$0xf]
    %v134 = vld [vmem:[%s130 + $0xc] sm:$0xf]
    %v135 = vld [vmem:[#allocation14] sm:$0x1]
    %v137 = vlaneseq
    %v138 = vshrl.u32 %v137, 7
    %v139 = vsub.s32 0, %v138
    %v140 = vrot.slane %v135, %v139
    %v150 = vunpack.c.l.b16 %v110
    %v151 = vunpack.c.l.b16 %v111
    %v152 = vunpack.c.l.b16 %v112
    %v153 = vunpack.c.l.b16 %v113
    %v154 = vunpack.c.l.b16 %v114
    %v155 = vunpack.c.l.b16 %v115
    %v156 = vunpack.c.l.b16 %v116
    %v157 = vunpack.c.l.b16 %v117
    %v158 = vpack.c.b16 %v151, %v150
    %v159 = vpack.c.b16 %v153, %v152
    %v160 = vpack.c.b16 %v155, %v154
    %v161 = vpack.c.b16 %v157, %v156
    %v166 = vunpack.c.l.b16 %v126
    %v167 = vunpack.c.l.b16 %v127
    %v168 = vunpack.c.l.b16 %v128
    %v169 = vunpack.c.l.b16 %v129
    %v170 = vpack.c.b16 %v167, %v166
    %v171 = vpack.c.b16 %v169, %v168
    %vm174 = vcmask 261120
    %v176 = vsel %vm174, %v158, 0
    %v179 = vsel %vm174, %v159, 0
    %v182 = vsel %vm174, %v160, 0
    %v185 = vsel %vm174, %v161, 0
    %187 = vmatprep.subr.bf16.mxu0 0
    %188 = vmatpush1.bf16.msra.mxu0 %v170
    %189 = vmatprep.subr.bf16.mxu0 0
    %190 = vmatpush1.bf16.msra.mxu0 %v171
    %191 = vmatprep.subr.bf16.mxu0 0
    %192 = vmatpush1.bf16.msra.mxu0 0
    %193 = vmatprep.subr.bf16.mxu0 0
    %194 = vmatpush1.bf16.msra.mxu0 0
    %195 = vmatprep.subr.bf16.mxu0 0
    %196 = vmatpush1.bf16.msra.mxu0 0
    %197 = vmatprep.subr.bf16.mxu0 0
    %198 = vmatpush1.bf16.msra.mxu0 0
    %199 = vmatprep.subr.bf16.mxu0 0
    %200 = vmatpush1.bf16.msra.mxu0 0
    %201 = vmatprep.subr.bf16.mxu0 0
    %202 = vmatpush1.bf16.msra.mxu0 0
    %203 = vmatprep.subr.bf16.mxu0 0
    %204 = vmatpush1.bf16.msra.mxu0 0
    %205 = vmatprep.subr.bf16.mxu0 0
    %206 = vmatpush1.bf16.msra.mxu0 0
    %207 = vmatprep.subr.bf16.mxu0 0
    %208 = vmatpush1.bf16.msra.mxu0 0
    %209 = vmatprep.subr.bf16.mxu0 0
    %210 = vmatpush1.bf16.msra.mxu0 0
    %211 = vmatprep.subr.bf16.mxu0 0
    %212 = vmatpush1.bf16.msra.mxu0 0
    %213 = vmatprep.subr.bf16.mxu0 0
    %214 = vmatpush1.bf16.msra.mxu0 0
    %215 = vmatprep.subr.bf16.mxu0 0
    %216 = vmatpush1.bf16.msra.mxu0 0
    %217 = vmatprep.subr.bf16.mxu0 0
    %218 = vmatpush1.bf16.msra.mxu0 0
    %219 = vmatprep.mubr.bf16.mxu0 0
    %220 = vmatmul.mubr.bf16.gmra.mrb[0].mxu0 %v176
    %v221 = vpop.f32.mrb[0].mxu0
    %v222 = vadd.f32 %v140, %v221
    %v223 = vpop.f32.mrb[0].mxu0
    %v224 = vpop.f32.mrb[0].mxu0
    %v225 = vadd.f32 %v140, %v224
    %v226 = vpop.f32.mrb[0].mxu0
    %227 = vmatprep.mubr.bf16.mxu0 0
    %228 = vmatmul.mubr.bf16.gmra.mrb[0].mxu0 %v179
    %v229 = vpop.f32.mrb[0].mxu0
    %v230 = vadd.f32 %v140, %v229
    %v231 = vpop.f32.mrb[0].mxu0
    %v232 = vpop.f32.mrb[0].mxu0
    %v233 = vadd.f32 %v140, %v232
    %v234 = vpop.f32.mrb[0].mxu0
    %235 = vmatprep.mubr.bf16.mxu0 0
    %236 = vmatmul.mubr.bf16.gmra.mrb[0].mxu0 %v182
    %v237 = vpop.f32.mrb[0].mxu0
    %v238 = vadd.f32 %v140, %v237
    %v239 = vpop.f32.mrb[0].mxu0
    %v240 = vpop.f32.mrb[0].mxu0
    %v241 = vadd.f32 %v140, %v240
    %v242 = vpop.f32.mrb[0].mxu0
    %243 = vmatprep.mubr.bf16.mxu0 0
    %244 = vmatmul.mubr.bf16.gmra.mrb[0].mxu0 %v185
    %v245 = vpop.f32.mrb[0].mxu0
    %v246 = vadd.f32 %v140, %v245
    %v247 = vpop.f32.mrb[0].mxu0
    %v248 = vpop.f32.mrb[0].mxu0
    %v249 = vadd.f32 %v140, %v248
    %v250 = vpop.f32.mrb[0].mxu0
    %251 = vdwg.mxu0
    %252 = vst [vmem:[#allocation2] sm:$0xff] %v222
    %253 = vst [vmem:[#allocation2 + $0x8] sm:$0xff] %v225
    %254 = vst [vmem:[#allocation2 + $0x10] sm:$0xff] %v230
    %255 = vst [vmem:[#allocation2 + $0x18] sm:$0xff] %v233
    %256 = vst [vmem:[#allocation2 + $0x20] sm:$0xff] %v238
    %257 = vst [vmem:[#allocation2 + $0x28] sm:$0xff] %v241
    %258 = vst [vmem:[#allocation2 + $0x30] sm:$0xff] %v246
    %259 = vst [vmem:[#allocation2 + $0x38] sm:$0xff] %v249
    %s260 = scalar_lea.vmem [#allocation14], 1
    %v261 = vld [vmem:[%s260] sm:$0x1]
    %v263 = vlaneseq
    %v264 = vshrl.u32 %v263, 7
    %v265 = vsub.s32 0, %v264
    %v266 = vrot.slane %v261, %v265
    %v276 = vunpack.c.l.b16 %v118
    %v277 = vunpack.c.l.b16 %v119
    %v278 = vunpack.c.l.b16 %v120
    %v279 = vunpack.c.l.b16 %v121
    %v280 = vunpack.c.l.b16 %v122
    %v281 = vunpack.c.l.b16 %v123
    %v282 = vunpack.c.l.b16 %v124
    %v283 = vunpack.c.l.b16 %v125
    %v284 = vpack.c.b16 %v277, %v276
    %v285 = vpack.c.b16 %v279, %v278
    %v286 = vpack.c.b16 %v281, %v280
    %v287 = vpack.c.b16 %v283, %v282
    %v292 = vunpack.c.l.b16 %v131
    %v293 = vunpack.c.l.b16 %v132
    %v294 = vunpack.c.l.b16 %v133
    %v295 = vunpack.c.l.b16 %v134
    %v296 = vpack.c.b16 %v293, %v292
    %v297 = vpack.c.b16 %v295, %v294
    %v301 = vsel %vm174, %v284, 0
    %v304 = vsel %vm174, %v285, 0
    %v307 = vsel %vm174, %v286, 0
    %v310 = vsel %vm174, %v287, 0
    %312 = vmatprep.subr.bf16.mxu0 0
    %313 = vmatpush1.bf16.msra.mxu0 %v296
    %314 = vmatprep.subr.bf16.mxu0 0
    %315 = vmatpush1.bf16.msra.mxu0 %v297
    %316 = vmatprep.subr.bf16.mxu0 0
    %317 = vmatpush1.bf16.msra.mxu0 0
    %318 = vmatprep.subr.bf16.mxu0 0
    %319 = vmatpush1.bf16.msra.mxu0 0
    %320 = vmatprep.subr.bf16.mxu0 0
    %321 = vmatpush1.bf16.msra.mxu0 0
    %322 = vmatprep.subr.bf16.mxu0 0
    %323 = vmatpush1.bf16.msra.mxu0 0
    %324 = vmatprep.subr.bf16.mxu0 0
    %325 = vmatpush1.bf16.msra.mxu0 0
    %326 = vmatprep.subr.bf16.mxu0 0
    %327 = vmatpush1.bf16.msra.mxu0 0
    %328 = vmatprep.subr.bf16.mxu0 0
    %329 = vmatpush1.bf16.msra.mxu0 0
    %330 = vmatprep.subr.bf16.mxu0 0
    %331 = vmatpush1.bf16.msra.mxu0 0
    %332 = vmatprep.subr.bf16.mxu0 0
    %333 = vmatpush1.bf16.msra.mxu0 0
    %334 = vmatprep.subr.bf16.mxu0 0
    %335 = vmatpush1.bf16.msra.mxu0 0
    %336 = vmatprep.subr.bf16.mxu0 0
    %337 = vmatpush1.bf16.msra.mxu0 0
    %338 = vmatprep.subr.bf16.mxu0 0
    %339 = vmatpush1.bf16.msra.mxu0 0
    %340 = vmatprep.subr.bf16.mxu0 0
    %341 = vmatpush1.bf16.msra.mxu0 0
    %342 = vmatprep.subr.bf16.mxu0 0
    %343 = vmatpush1.bf16.msra.mxu0 0
    %344 = vmatprep.mubr.bf16.mxu0 0
    %345 = vmatmul.mubr.bf16.gmra.mrb[0].mxu0 %v301
    %v346 = vpop.f32.mrb[0].mxu0
    %v347 = vadd.f32 %v266, %v346
    %v348 = vpop.f32.mrb[0].mxu0
    %v349 = vpop.f32.mrb[0].mxu0
    %v350 = vadd.f32 %v266, %v349
    %v351 = vpop.f32.mrb[0].mxu0
    %352 = vmatprep.mubr.bf16.mxu0 0
    %353 = vmatmul.mubr.bf16.gmra.mrb[0].mxu0 %v304
    %v354 = vpop.f32.mrb[0].mxu0
    %v355 = vadd.f32 %v266, %v354
    %v356 = vpop.f32.mrb[0].mxu0
    %v357 = vpop.f32.mrb[0].mxu0
    %v358 = vadd.f32 %v266, %v357
    %v359 = vpop.f32.mrb[0].mxu0
    %360 = vmatprep.mubr.bf16.mxu0 0
    %361 = vmatmul.mubr.bf16.gmra.mrb[0].mxu0 %v307
    %v362 = vpop.f32.mrb[0].mxu0
    %v363 = vadd.f32 %v266, %v362
    %v364 = vpop.f32.mrb[0].mxu0
    %v365 = vpop.f32.mrb[0].mxu0
    %v366 = vadd.f32 %v266, %v365
    %v367 = vpop.f32.mrb[0].mxu0
    %368 = vmatprep.mubr.bf16.mxu0 0
    %369 = vmatmul.mubr.bf16.gmra.mrb[0].mxu0 %v310
    %v370 = vpop.f32.mrb[0].mxu0
    %v371 = vadd.f32 %v266, %v370
    %v372 = vpop.f32.mrb[0].mxu0
    %v373 = vpop.f32.mrb[0].mxu0
    %v374 = vadd.f32 %v266, %v373
    %v375 = vpop.f32.mrb[0].mxu0
    %376 = vdwg.mxu0
    %377 = vst [vmem:[#allocation3] sm:$0xff] %v347
    %378 = vst [vmem:[#allocation3 + $0x8] sm:$0xff] %v350
    %379 = vst [vmem:[#allocation3 + $0x10] sm:$0xff] %v355
    %380 = vst [vmem:[#allocation3 + $0x18] sm:$0xff] %v358
    %381 = vst [vmem:[#allocation3 + $0x20] sm:$0xff] %v363
    %382 = vst [vmem:[#allocation3 + $0x28] sm:$0xff] %v366
    %383 = vst [vmem:[#allocation3 + $0x30] sm:$0xff] %v371
    %384 = vst [vmem:[#allocation3 + $0x38] sm:$0xff] %v374
    %v385 = vld [vmem:[#allocation12] sm:$0xf]
    %v386 = vld [vmem:[#allocation12 + $0x4] sm:$0xf]
    %v387 = vld [vmem:[#allocation12 + $0x8] sm:$0xf]
    %v388 = vld [vmem:[#allocation12 + $0xc] sm:$0xf]
    %s389 = scalar_lea.vmem [#allocation12], 16
    %v390 = vld [vmem:[%s389] sm:$0xf]
    %v391 = vld [vmem:[%s389 + $0x4] sm:$0xf]
    %v392 = vld [vmem:[%s389 + $0x8] sm:$0xf]
    %v393 = vld [vmem:[%s389 + $0xc] sm:$0xf]
    loop: start=0, step=1, limit=8
    $region46: #{elmo_forward.6} parent=1 // loop_pre_header
      _
    $region47: #{elmo_forward.6} parent=1 // loop_header
      %s395 = sphi 0, %s399
      %p396 = scmp.ge.s32.totalorder %s395, 8
    $region48: #{elmo_forward.6} parent=1 // loop_header_branch
      %398 = sbr.rel (%p396) target = $region52
    $region49: #{elmo_forward.6} parent=1 // loop_body
      %s400 = ssub.s32 7, %s395
      %s401 = smul.u32 %s395, 8
      %s402 = scalar_lea.vmem [#allocation2], %s401
      %v403 = vld [vmem:[%s402] sm:$0xff]
      %v404 = vld [vmem:[#allocation4] sm:$0xff]
      %v405 = vpack.c.bf16 %v404, %v404
      %v410 = vunpack.c.l.b16 %v385
      %v411 = vunpack.c.l.b16 %v386
      %v412 = vunpack.c.l.b16 %v387
      %v413 = vunpack.c.l.b16 %v388
      %v414 = vpack.c.b16 %v411, %v410
      %v415 = vpack.c.b16 %v413, %v412
      %v419 = vsel %vm174, %v405, 0
      %421 = vmatprep.subr.bf16.mxu0 0
      %422 = vmatpush1.bf16.msra.mxu0 %v414
      %423 = vmatprep.subr.bf16.mxu0 0
      %424 = vmatpush1.bf16.msra.mxu0 %v415
      %425 = vmatprep.subr.bf16.mxu0 0
      %426 = vmatpush1.bf16.msra.mxu0 0
      %427 = vmatprep.subr.bf16.mxu0 0
      %428 = vmatpush1.bf16.msra.mxu0 0
      %429 = vmatprep.subr.bf16.mxu0 0
      %430 = vmatpush1.bf16.msra.mxu0 0
      %431 = vmatprep.subr.bf16.mxu0 0
      %432 = vmatpush1.bf16.msra.mxu0 0
      %433 = vmatprep.subr.bf16.mxu0 0
      %434 = vmatpush1.bf16.msra.mxu0 0
      %435 = vmatprep.subr.bf16.mxu0 0
      %436 = vmatpush1.bf16.msra.mxu0 0
      %437 = vmatprep.subr.bf16.mxu0 0
      %438 = vmatpush1.bf16.msra.mxu0 0
      %439 = vmatprep.subr.bf16.mxu0 0
      %440 = vmatpush1.bf16.msra.mxu0 0
      %441 = vmatprep.subr.bf16.mxu0 0
      %442 = vmatpush1.bf16.msra.mxu0 0
      %443 = vmatprep.subr.bf16.mxu0 0
      %444 = vmatpush1.bf16.msra.mxu0 0
      %445 = vmatprep.subr.bf16.mxu0 0
      %446 = vmatpush1.bf16.msra.mxu0 0
      %447 = vmatprep.subr.bf16.mxu0 0
      %448 = vmatpush1.bf16.msra.mxu0 0
      %449 = vmatprep.subr.bf16.mxu0 0
      %450 = vmatpush1.bf16.msra.mxu0 0
      %451 = vmatprep.subr.bf16.mxu0 0
      %452 = vmatpush1.bf16.msra.mxu0 0
      %453 = vmatprep.mubr.bf16.mxu0 0
      %454 = vmatmul.mubr.bf16.gmra.mrb[0].mxu0 %v419
      %v455 = vpop.f32.mrb[0].mxu0
      %v456 = vadd.f32 0.0, %v455
      %v457 = vpop.f32.mrb[0].mxu0
      %v458 = vpop.f32.mrb[0].mxu0
      %v459 = vpop.f32.mrb[0].mxu0
      %460 = vdwg.mxu0
      %v461 = vadd.f32 %v403, %v456
      %s462 = smul.u32 %s400, 8
      %s463 = scalar_lea.vmem [#allocation3], %s462
      %v464 = vld [vmem:[%s463] sm:$0xff]
      %s465 = scalar_lea.vmem [#allocation4], 8
      %v466 = vld [vmem:[%s465] sm:$0xff]
      %v467 = vpack.c.bf16 %v466, %v466
      %v472 = vunpack.c.l.b16 %v390
      %v473 = vunpack.c.l.b16 %v391
      %v474 = vunpack.c.l.b16 %v392
      %v475 = vunpack.c.l.b16 %v393
      %v476 = vpack.c.b16 %v473, %v472
      %v477 = vpack.c.b16 %v475, %v474
      %v481 = vsel %vm174, %v467, 0
      %483 = vmatprep.subr.bf16.mxu0 0
      %484 = vmatpush1.bf16.msra.mxu0 %v476
      %485 = vmatprep.subr.bf16.mxu0 0
      %486 = vmatpush1.bf16.msra.mxu0 %v477
      %487 = vmatprep.subr.bf16.mxu0 0
      %488 = vmatpush1.bf16.msra.mxu0 0
      %489 = vmatprep.subr.bf16.mxu0 0
      %490 = vmatpush1.bf16.msra.mxu0 0
      %491 = vmatprep.subr.bf16.mxu0 0
      %492 = vmatpush1.bf16.msra.mxu0 0
      %493 = vmatprep.subr.bf16.mxu0 0
      %494 = vmatpush1.bf16.msra.mxu0 0
      %495 = vmatprep.subr.bf16.mxu0 0
      %496 = vmatpush1.bf16.msra.mxu0 0
      %497 = vmatprep.subr.bf16.mxu0 0
      %498 = vmatpush1.bf16.msra.mxu0 0
      %499 = vmatprep.subr.bf16.mxu0 0
      %500 = vmatpush1.bf16.msra.mxu0 0
      %501 = vmatprep.subr.bf16.mxu0 0
      %502 = vmatpush1.bf16.msra.mxu0 0
      %503 = vmatprep.subr.bf16.mxu0 0
      %504 = vmatpush1.bf16.msra.mxu0 0
      %505 = vmatprep.subr.bf16.mxu0 0
      %506 = vmatpush1.bf16.msra.mxu0 0
      %507 = vmatprep.subr.bf16.mxu0 0
      %508 = vmatpush1.bf16.msra.mxu0 0
      %509 = vmatprep.subr.bf16.mxu0 0
      %510 = vmatpush1.bf16.msra.mxu0 0
      %511 = vmatprep.subr.bf16.mxu0 0
      %512 = vmatpush1.bf16.msra.mxu0 0
      %513 = vmatprep.subr.bf16.mxu0 0
      %514 = vmatpush1.bf16.msra.mxu0 0
      %515 = vmatprep.mubr.bf16.mxu0 0
      %516 = vmatmul.mubr.bf16.gmra.mrb[0].mxu0 %v481
      %v517 = vpop.f32.mrb[0].mxu0
      %v518 = vadd.f32 0.0, %v517
      %v519 = vpop.f32.mrb[0].mxu0
      %v520 = vpop.f32.mrb[0].mxu0
      %v521 = vpop.f32.mrb[0].mxu0
      %522 = vdwg.mxu0
      %v523 = vadd.f32 %v464, %v518
      %v524 = vld [vmem:[#allocation5] sm:$0xff]
      %v525 = vmul.f32 %v461, 0.5
      %v526 = vtanh.pop %v525
      %v527 = vmul.f32 %v526, 0.5
      %v528 = vadd.f32 %v527, 0.5
      %v529 = vtanh.pop %v461
      %531 = vrot.lane.b32.xlu0 %v524, 32
      %v532 = vpop.permute.xlu0 %531
      %v534 = vmul.f32 %v528, %v532
      %536 = vrot.lane.b32.xlu0 %v529, 64
      %v537 = vpop.permute.xlu0 %536
      %v539 = vmul.f32 %v528, %v537
      %541 = vrot.lane.b32.xlu0 %v539, 32
      %v542 = vpop.permute.xlu0 %541
      %v544 = vadd.f32 %v534, %v542
      %v545 = vtanh.pop %v544
      %547 = vrot.lane.b32.xlu0 %v545, 64
      %v548 = vpop.permute.xlu0 %547
      %v550 = vmul.f32 %v528, %v548
      %s551 = scalar_lea.vmem [#allocation5], 8
      %v552 = vld [vmem:[%s551] sm:$0xff]
      %v553 = vmul.f32 %v523, 0.5
      %v554 = vtanh.pop %v553
      %v555 = vmul.f32 %v554, 0.5
      %v556 = vadd.f32 %v555, 0.5
      %v557 = vtanh.pop %v523
      %559 = vrot.lane.b32.xlu0 %v552, 32
      %v560 = vpop.permute.xlu0 %559
      %v562 = vmul.f32 %v556, %v560
      %564 = vrot.lane.b32.xlu0 %v557, 64
      %v565 = vpop.permute.xlu0 %564
      %v567 = vmul.f32 %v556, %v565
      %569 = vrot.lane.b32.xlu0 %v567, 32
      %v570 = vpop.permute.xlu0 %569
      %v572 = vadd.f32 %v562, %v570
      %v573 = vtanh.pop %v572
      %575 = vrot.lane.b32.xlu0 %v573, 64
      %v576 = vpop.permute.xlu0 %575
      %v578 = vmul.f32 %v556, %v576
      %580 = vrot.lane.b32.xlu0 %v550, 32
      %v581 = vpop.permute.xlu0 %580
      %583 = vst.msk [vmem:[#allocation4] sm:$0xff] %vm174, %v581
      %585 = vrot.lane.b32.xlu0 %v544, 96
      %v586 = vpop.permute.xlu0 %585
      %588 = vst.msk [vmem:[#allocation5] sm:$0xff] %vm174, %v586
      %590 = vrot.lane.b32.xlu0 %v578, 32
      %v591 = vpop.permute.xlu0 %590
      %593 = vst.msk [vmem:[%s465] sm:$0xff] %vm174, %v591
      %595 = vrot.lane.b32.xlu0 %v572, 96
      %v596 = vpop.permute.xlu0 %595
      %598 = vst.msk [vmem:[%s551] sm:$0xff] %vm174, %v596
      %v599 = vpack.c.bf16 %v550, %v550
      %v601 = vunpack.c.l.b16 %v599
      %v602 = vpack.c.b16 %v601, %v601
      %603 = vrot.lane.b32.xlu0 %v602, 32
      %v604 = vpop.permute.xlu0 %603
      %s606 = smul.addr %s395, 4
      %s607 = scalar_lea.vmem [#allocation15], %s606
      %vm608 = vcmask 257024
      %609 = vst.msk [vmem:[%s607] sm:$0xf] %vm608, %v604
      %v610 = vpack.c.bf16 %v578, %v578
      %v612 = vunpack.c.l.b16 %v610
      %v613 = vpack.c.b16 %v612, %v612
      %614 = vrot.lane.b32.xlu0 %v613, 32
      %v615 = vpop.permute.xlu0 %614
      %s617 = smul.addr %s400, 4
      %s618 = scalar_lea.vmem [#allocation16], %s617
      %619 = vst.msk [vmem:[%s618] sm:$0xf] %vm608, %v615
    $region50: #{elmo_forward.6} parent=1 // loop_footer
      %s399 = sadd.s32 1, %s395
    $region51: #{elmo_forward.6} parent=1 // loop_footer_branch
      %394 = sbr.rel target = $region47
    $region52: #{elmo_forward.6} parent=1 // loop_exit
      _
    // Predicated region
    $region53: #{elmo_forward.6} parent=1 // pred_check
      _
    $region54: #{elmo_forward.6} parent=1 // pred_check_branch
      %621 = sbr.rel (0) target = $region56
    $region55: #{elmo_forward.6} parent=1 // pred_region
      %s623 = ssub.s32 512, 512
      %624 = vsyncadd [#allocation8], %s623
      %s625 = sshll.u32 [#allocation15], 4
      %s626 = int_to_ptr.vmem [resolvable:$true] %s625
      %631 = dma.vmem_to_hbm [thread:$0]  %s626, 512, %s5, [#allocation8], 64, 64, 4
    $region56: #{elmo_forward.6} parent=1 // pred_fallthru
      _
    // Predicated region
    $region57: #{elmo_forward.6} parent=1 // pred_check
      _
    $region58: #{elmo_forward.6} parent=1 // pred_check_branch
      %633 = sbr.rel (0) target = $region60
    $region59: #{elmo_forward.6} parent=1 // pred_region
      %s634 = ssub.s32 0, 0
      %s635 = smul.u32 8, %s634
      %s637 = ssub.s32 512, 512
      %638 = vsyncadd [#allocation17], %s637
      %s639 = smul.addr %s635, 64
      %s640 = scalar_lea.hbm %s6, %s639
      %s641 = sshll.u32 [#allocation16], 4
      %s642 = int_to_ptr.vmem [resolvable:$true] %s641
      %647 = dma.vmem_to_hbm [thread:$0]  %s642, 512, %s640, [#allocation17], 64, 64, 4
    $region60: #{elmo_forward.6} parent=1 // pred_fallthru
      _
    // Predicated region
    $region61: #{elmo_forward.6} parent=1 // pred_check
      _
    $region62: #{elmo_forward.6} parent=1 // pred_check_branch
      %649 = sbr.rel (0) target = $region64
    $region63: #{elmo_forward.6} parent=1 // pred_region
      %650 = dma.done [#allocation8], 512
    $region64: #{elmo_forward.6} parent=1 // pred_fallthru
      _
    // Predicated region
    $region65: #{elmo_forward.6} parent=1 // pred_check
      _
    $region66: #{elmo_forward.6} parent=1 // pred_check_branch
      %652 = sbr.rel (0) target = $region68
    $region67: #{elmo_forward.6} parent=1 // pred_region
      %653 = dma.done [#allocation17], 512
    $region68: #{elmo_forward.6} parent=1 // pred_fallthru
      _
    %654 = vsyncpa [#allocation7], 1
    %655 = vsyncpa [#allocation10], 1
    %656 = vsyncpa [#allocation13], 1
    %657 = vsyncpa [#allocation8], 1
    %658 = vsyncpa [#allocation17], 1

// kernel: elmo_forward.7
$region0: #{elmo_forward.7}
  #allocation0 [shape = 'u32[]', space=smem, size = 0x4, offset = 0x4, fixed_abs, tag = 'smem constant byte address 0x4 - core index']
  #allocation1 [shape = 'u32[144,128]{1,0:T(1,128)}', space=vmem, size = 0x12000, scoped, tag = 'internal scratch']
  #allocation2 [shape = 'f32[8,8,128]{2,1,0:T(8,128)}', space=vmem, size = 0x8000, scoped, tag = 'scratch operand']
  #allocation3 [shape = 'f32[8,8,128]{2,1,0:T(8,128)}', space=vmem, size = 0x8000, scoped, tag = 'scratch operand']
  #allocation4 [shape = 'f32[2,8,32]{2,1,0:T(8,128)}', space=vmem, size = 0x2000, scoped, tag = 'scratch operand']
  #allocation5 [shape = 'f32[2,8,32]{2,1,0:T(8,128)}', space=vmem, size = 0x2000, scoped, tag = 'scratch operand']
  %s0 = inlined_call_operand.hbm [shape: bf16[8,8,32], index: 0, kind: input, shape index: {}, may-alias: {0,1}]
  %s1 = inlined_call_operand.hbm [shape: bf16[8,8,32], index: 1, kind: input, shape index: {}, may-alias: {0,1}]
  %s2 = inlined_call_operand.hbm [shape: bf16[8,8,32], index: 2, kind: input, shape index: {}, may-alias: {2,3}]
  %s3 = inlined_call_operand.hbm [shape: bf16[8,8,32], index: 3, kind: input, shape index: {}, may-alias: {2,3}]
  %s4 = inlined_call_operand.hbm [shape: bf16[2,2,32,128], index: 4, kind: input, shape index: {}]
  %s5 = inlined_call_operand.hbm [shape: bf16[2,32,128], index: 5, kind: input, shape index: {}]
  %s6 = inlined_call_operand.hbm [shape: f32[2,1,128], index: 6, kind: input, shape index: {}]
  %s7 = inlined_call_operand.hbm [shape: bf16[8,8,32], index: 7, kind: output, shape index: {0}]
  %s8 = inlined_call_operand.hbm [shape: bf16[8,8,32], index: 8, kind: output, shape index: {1}]
  %9 = xla_tuple %s7, %s8
  %s10 = sld [smem:[#allocation0]]
  $region85: #{elmo_forward.7} parent=0
    _
  %s12 = ssub.s32 1, %s10
  %s13 = scalar_select 0, %s12, %s10
  $region1: #{elmo_forward.7} parent=0
    #allocation6 [shape = 'u8[16384]{0}', space=vmem, size = 0x4000, scoped, tag = 'input window, operand 0, single buffered']
    #allocation7 [shape = 's32[1]{0}', space=sflag, size = 0x4, scoped, tag = 'scoped memory for elmo_forward.7']
    #allocation8 [shape = 's32[1]{0}', space=sflag, size = 0x4, scoped, tag = 'scoped memory for elmo_forward.7']
    #allocation9 [shape = 'u8[16384]{0}', space=vmem, size = 0x4000, scoped, tag = 'input window, operand 1, single buffered']
    #allocation10 [shape = 's32[1]{0}', space=sflag, size = 0x4, scoped, tag = 'scoped memory for elmo_forward.7']
    #allocation11 [shape = 'u8[16384]{0}', space=vmem, size = 0x4000, scoped, tag = 'input window, operand 2, single buffered']
    #allocation12 [shape = 'u8[16384]{0}', space=vmem, size = 0x4000, scoped, tag = 'input window, operand 3, single buffered']
    #allocation13 [shape = 's32[1]{0}', space=sflag, size = 0x4, scoped, tag = 'scoped memory for elmo_forward.7']
    #allocation14 [shape = 'u8[32768]{0}', space=vmem, size = 0x8000, scoped, tag = 'input window, operand 4, single buffered']
    #allocation15 [shape = 'u8[16384]{0}', space=vmem, size = 0x4000, scoped, tag = 'input window, operand 5, single buffered']
    #allocation16 [shape = 's32[1]{0}', space=sflag, size = 0x4, scoped, tag = 'scoped memory for elmo_forward.7']
    #allocation17 [shape = 'u8[1024]{0}', space=vmem, size = 0x400, scoped, tag = 'input window, operand 6, single buffered']
    #allocation18 [shape = 'u8[16384]{0}', space=vmem, size = 0x4000, scoped, tag = 'output window, operand 0, single buffered']
    #allocation19 [shape = 'u8[16384]{0}', space=vmem, size = 0x4000, scoped, tag = 'output window, operand 1, single buffered']
    #allocation20 [shape = 's32[1]{0}', space=sflag, size = 0x4, scoped, tag = 'scoped memory for elmo_forward.7']
    %14 = vsyncpa [#allocation7], 0
    %15 = vsyncpa [#allocation10], 0
    %16 = vsyncpa [#allocation13], 0
    %17 = vsyncpa [#allocation16], 0
    %18 = vsyncpa [#allocation8], 0
    %19 = vsyncpa [#allocation20], 0
    // Predicated region
    $region2: #{elmo_forward.7} parent=1 // pred_check
      _
    $region3: #{elmo_forward.7} parent=1 // pred_check_branch
      %21 = sbr.rel (0) target = $region5
    $region4: #{elmo_forward.7} parent=1 // pred_region
      %s23 = ssub.s32 512, 512
      %24 = vsyncadd [#allocation7], %s23
      %s25 = sshll.u32 [#allocation6], 4
      %s26 = int_to_ptr.vmem [resolvable:$true] %s25
      %31 = dma.hbm_to_vmem [thread:$0]  %s0, 512, %s26, [#allocation7], 64, 64, 4
    $region5: #{elmo_forward.7} parent=1 // pred_fallthru
      _
    // Predicated region
    $region6: #{elmo_forward.7} parent=1 // pred_check
      _
    $region7: #{elmo_forward.7} parent=1 // pred_check_branch
      %33 = sbr.rel (0) target = $region9
    $region8: #{elmo_forward.7} parent=1 // pred_region
      %s34 = ssub.s32 0, 0
      %s35 = smul.u32 8, %s34
      %s37 = ssub.s32 512, 512
      %38 = vsyncadd [#allocation10], %s37
      %s39 = smul.addr %s35, 64
      %s40 = scalar_lea.hbm %s1, %s39
      %s41 = sshll.u32 [#allocation9], 4
      %s42 = int_to_ptr.vmem [resolvable:$true] %s41
      %47 = dma.hbm_to_vmem [thread:$0]  %s40, 512, %s42, [#allocation10], 64, 64, 4
    $region9: #{elmo_forward.7} parent=1 // pred_fallthru
      _
    // Predicated region
    $region10: #{elmo_forward.7} parent=1 // pred_check
      _
    $region11: #{elmo_forward.7} parent=1 // pred_check_branch
      %49 = sbr.rel (0) target = $region13
    $region12: #{elmo_forward.7} parent=1 // pred_region
      %s51 = ssub.s32 512, 512
      %52 = vsyncadd [#allocation10], %s51
      %s53 = sshll.u32 [#allocation11], 4
      %s54 = int_to_ptr.vmem [resolvable:$true] %s53
      %59 = dma.hbm_to_vmem [thread:$0]  %s2, 512, %s54, [#allocation10], 64, 64, 4
    $region13: #{elmo_forward.7} parent=1 // pred_fallthru
      _
    // Predicated region
    $region14: #{elmo_forward.7} parent=1 // pred_check
      _
    $region15: #{elmo_forward.7} parent=1 // pred_check_branch
      %61 = sbr.rel (0) target = $region17
    $region16: #{elmo_forward.7} parent=1 // pred_region
      %s62 = ssub.s32 0, 0
      %s63 = smul.u32 8, %s62
      %s65 = ssub.s32 512, 512
      %66 = vsyncadd [#allocation13], %s65
      %s67 = smul.addr %s63, 64
      %s68 = scalar_lea.hbm %s3, %s67
      %s69 = sshll.u32 [#allocation12], 4
      %s70 = int_to_ptr.vmem [resolvable:$true] %s69
      %75 = dma.hbm_to_vmem [thread:$0]  %s68, 512, %s70, [#allocation13], 64, 64, 4
    $region17: #{elmo_forward.7} parent=1 // pred_fallthru
      _
    // Predicated region
    $region18: #{elmo_forward.7} parent=1 // pred_check
      _
    $region19: #{elmo_forward.7} parent=1 // pred_check_branch
      %77 = sbr.rel (0) target = $region21
    $region20: #{elmo_forward.7} parent=1 // pred_region
      %s79 = ssub.s32 1024, 1024
      %80 = vsyncadd [#allocation13], %s79
      %s81 = sshll.u32 [#allocation14], 4
      %s82 = int_to_ptr.vmem [resolvable:$true] %s81
      %87 = dma.hbm_to_vmem [thread:$0]  %s4, 1024, %s82, [#allocation13], 64, 64, 4
    $region21: #{elmo_forward.7} parent=1 // pred_fallthru
      _
    // Predicated region
    $region22: #{elmo_forward.7} parent=1 // pred_check
      _
    $region23: #{elmo_forward.7} parent=1 // pred_check_branch
      %89 = sbr.rel (0) target = $region25
    $region24: #{elmo_forward.7} parent=1 // pred_region
      %s91 = ssub.s32 512, 512
      %92 = vsyncadd [#allocation16], %s91
      %s93 = sshll.u32 [#allocation15], 4
      %s94 = int_to_ptr.vmem [resolvable:$true] %s93
      %99 = dma.hbm_to_vmem [thread:$0]  %s5, 512, %s94, [#allocation16], 64, 64, 4
    $region25: #{elmo_forward.7} parent=1 // pred_fallthru
      _
    // Predicated region
    $region26: #{elmo_forward.7} parent=1 // pred_check
      _
    $region27: #{elmo_forward.7} parent=1 // pred_check_branch
      %101 = sbr.rel (0) target = $region29
    $region28: #{elmo_forward.7} parent=1 // pred_region
      %s103 = ssub.s32 32, 32
      %104 = vsyncadd [#allocation16], %s103
      %s105 = sshll.u32 [#allocation17], 4
      %s106 = int_to_ptr.vmem [resolvable:$true] %s105
      %111 = dma.hbm_to_vmem [thread:$0]  %s6, 32, %s106, [#allocation16], 16, 16, 1
    $region29: #{elmo_forward.7} parent=1 // pred_fallthru
      _
    // Predicated region
    $region30: #{elmo_forward.7} parent=1 // pred_check
      _
    $region31: #{elmo_forward.7} parent=1 // pred_check_branch
      %113 = sbr.rel (0) target = $region33
    $region32: #{elmo_forward.7} parent=1 // pred_region
      %114 = dma.done [#allocation7], 512
    $region33: #{elmo_forward.7} parent=1 // pred_fallthru
      _
    // Predicated region
    $region34: #{elmo_forward.7} parent=1 // pred_check
      _
    $region35: #{elmo_forward.7} parent=1 // pred_check_branch
      %116 = sbr.rel (0) target = $region37
    $region36: #{elmo_forward.7} parent=1 // pred_region
      %117 = dma.done [#allocation10], 512
    $region37: #{elmo_forward.7} parent=1 // pred_fallthru
      _
    // Predicated region
    $region38: #{elmo_forward.7} parent=1 // pred_check
      _
    $region39: #{elmo_forward.7} parent=1 // pred_check_branch
      %119 = sbr.rel (0) target = $region41
    $region40: #{elmo_forward.7} parent=1 // pred_region
      %120 = dma.done [#allocation10], 512
    $region41: #{elmo_forward.7} parent=1 // pred_fallthru
      _
    // Predicated region
    $region42: #{elmo_forward.7} parent=1 // pred_check
      _
    $region43: #{elmo_forward.7} parent=1 // pred_check_branch
      %122 = sbr.rel (0) target = $region45
    $region44: #{elmo_forward.7} parent=1 // pred_region
      %123 = dma.done [#allocation13], 512
    $region45: #{elmo_forward.7} parent=1 // pred_fallthru
      _
    // Predicated region
    $region46: #{elmo_forward.7} parent=1 // pred_check
      _
    $region47: #{elmo_forward.7} parent=1 // pred_check_branch
      %125 = sbr.rel (0) target = $region49
    $region48: #{elmo_forward.7} parent=1 // pred_region
      %126 = dma.done [#allocation13], 1024
    $region49: #{elmo_forward.7} parent=1 // pred_fallthru
      _
    // Predicated region
    $region50: #{elmo_forward.7} parent=1 // pred_check
      _
    $region51: #{elmo_forward.7} parent=1 // pred_check_branch
      %128 = sbr.rel (0) target = $region53
    $region52: #{elmo_forward.7} parent=1 // pred_region
      %129 = dma.done [#allocation16], 512
    $region53: #{elmo_forward.7} parent=1 // pred_fallthru
      _
    // Predicated region
    $region54: #{elmo_forward.7} parent=1 // pred_check
      _
    $region55: #{elmo_forward.7} parent=1 // pred_check_branch
      %131 = sbr.rel (0) target = $region57
    $region56: #{elmo_forward.7} parent=1 // pred_region
      %132 = dma.done [#allocation16], 32
    $region57: #{elmo_forward.7} parent=1 // pred_fallthru
      _
    %s133 = ssub.s32 0, 0
    %s134 = smul.u32 8, %s133
    %s135 = ssub.s32 0, 0
    %s136 = smul.u32 8, %s135
    %s137 = ssub.s32 0, 0
    %s138 = smul.u32 8, %s137
    %p140 = scmp.eq.s32.totalorder 0, 0
    // Predicated region
    $region58: #{elmo_forward.7} parent=1 // pred_check
      %p141 = pneg %p140
    $region59: #{elmo_forward.7} parent=1 // pred_check_branch
      %143 = sbr.rel (%p141) target = $region61
    $region60: #{elmo_forward.7} parent=1 // pred_region
      %vm144 = vcmask 261120
      %145 = vst.msk [vmem:[#allocation4] sm:$0xff] %vm144, 0.0
      %146 = vst.msk [vmem:[#allocation4 + $0x8] sm:$0xff] %vm144, 0.0
      %147 = vst.msk [vmem:[#allocation5] sm:$0xff] %vm144, 0.0
      %148 = vst.msk [vmem:[#allocation5 + $0x8] sm:$0xff] %vm144, 0.0
    $region61: #{elmo_forward.7} parent=1 // pred_fallthru
      _
    %v149 = vld [vmem:[#allocation6] sm:$0xf]
    %v150 = vld [vmem:[#allocation6 + $0x4] sm:$0xf]
    %v151 = vld [vmem:[#allocation6 + $0x8] sm:$0xf]
    %v152 = vld [vmem:[#allocation6 + $0xc] sm:$0xf]
    %v153 = vld [vmem:[#allocation6 + $0x10] sm:$0xf]
    %v154 = vld [vmem:[#allocation6 + $0x14] sm:$0xf]
    %v155 = vld [vmem:[#allocation6 + $0x18] sm:$0xf]
    %v156 = vld [vmem:[#allocation6 + $0x1c] sm:$0xf]
    %v157 = vld [vmem:[#allocation9] sm:$0xf]
    %v158 = vld [vmem:[#allocation9 + $0x4] sm:$0xf]
    %v159 = vld [vmem:[#allocation9 + $0x8] sm:$0xf]
    %v160 = vld [vmem:[#allocation9 + $0xc] sm:$0xf]
    %v161 = vld [vmem:[#allocation9 + $0x10] sm:$0xf]
    %v162 = vld [vmem:[#allocation9 + $0x14] sm:$0xf]
    %v163 = vld [vmem:[#allocation9 + $0x18] sm:$0xf]
    %v164 = vld [vmem:[#allocation9 + $0x1c] sm:$0xf]
    %v165 = vld [vmem:[#allocation14] sm:$0xf]
    %v166 = vld [vmem:[#allocation14 + $0x4] sm:$0xf]
    %v167 = vld [vmem:[#allocation14 + $0x8] sm:$0xf]
    %v168 = vld [vmem:[#allocation14 + $0xc] sm:$0xf]
    %s169 = scalar_lea.vmem [#allocation14], 32
    %v170 = vld [vmem:[%s169] sm:$0xf]
    %v171 = vld [vmem:[%s169 + $0x4] sm:$0xf]
    %v172 = vld [vmem:[%s169 + $0x8] sm:$0xf]
    %v173 = vld [vmem:[%s169 + $0xc] sm:$0xf]
    %v174 = vld [vmem:[#allocation11] sm:$0xf]
    %v175 = vld [vmem:[#allocation11 + $0x4] sm:$0xf]
    %v176 = vld [vmem:[#allocation11 + $0x8] sm:$0xf]
    %v177 = vld [vmem:[#allocation11 + $0xc] sm:$0xf]
    %v178 = vld [vmem:[#allocation11 + $0x10] sm:$0xf]
    %v179 = vld [vmem:[#allocation11 + $0x14] sm:$0xf]
    %v180 = vld [vmem:[#allocation11 + $0x18] sm:$0xf]
    %v181 = vld [vmem:[#allocation11 + $0x1c] sm:$0xf]
    %v182 = vld [vmem:[#allocation12] sm:$0xf]
    %v183 = vld [vmem:[#allocation12 + $0x4] sm:$0xf]
    %v184 = vld [vmem:[#allocation12 + $0x8] sm:$0xf]
    %v185 = vld [vmem:[#allocation12 + $0xc] sm:$0xf]
    %v186 = vld [vmem:[#allocation12 + $0x10] sm:$0xf]
    %v187 = vld [vmem:[#allocation12 + $0x14] sm:$0xf]
    %v188 = vld [vmem:[#allocation12 + $0x18] sm:$0xf]
    %v189 = vld [vmem:[#allocation12 + $0x1c] sm:$0xf]
    %s190 = scalar_lea.vmem [#allocation14], 16
    %v191 = vld [vmem:[%s190] sm:$0xf]
    %v192 = vld [vmem:[%s190 + $0x4] sm:$0xf]
    %v193 = vld [vmem:[%s190 + $0x8] sm:$0xf]
    %v194 = vld [vmem:[%s190 + $0xc] sm:$0xf]
    %v203 = vunpack.c.l.b16 %v174
    %v204 = vunpack.c.l.b16 %v175
    %v205 = vunpack.c.l.b16 %v176
    %v206 = vunpack.c.l.b16 %v177
    %v207 = vunpack.c.l.b16 %v178
    %v208 = vunpack.c.l.b16 %v179
    %v209 = vunpack.c.l.b16 %v180
    %v210 = vunpack.c.l.b16 %v181
    %v211 = vpack.c.b16 %v204, %v203
    %v212 = vpack.c.b16 %v206, %v205
    %v213 = vpack.c.b16 %v208, %v207
    %v214 = vpack.c.b16 %v210, %v209
    %v219 = vunpack.c.l.b16 %v191
    %v220 = vunpack.c.l.b16 %v192
    %v221 = vunpack.c.l.b16 %v193
    %v222 = vunpack.c.l.b16 %v194
    %v223 = vpack.c.b16 %v220, %v219
    %v224 = vpack.c.b16 %v222, %v221
    %vm227 = vcmask 261120
    %v229 = vsel %vm227, %v211, 0
    %v232 = vsel %vm227, %v212, 0
    %v235 = vsel %vm227, %v213, 0
    %v238 = vsel %vm227, %v214, 0
    %240 = vmatprep.subr.bf16.mxu0 0
    %241 = vmatpush1.bf16.msra.mxu0 %v223
    %242 = vmatprep.subr.bf16.mxu0 0
    %243 = vmatpush1.bf16.msra.mxu0 %v224
    %244 = vmatprep.subr.bf16.mxu0 0
    %245 = vmatpush1.bf16.msra.mxu0 0
    %246 = vmatprep.subr.bf16.mxu0 0
    %247 = vmatpush1.bf16.msra.mxu0 0
    %248 = vmatprep.subr.bf16.mxu0 0
    %249 = vmatpush1.bf16.msra.mxu0 0
    %250 = vmatprep.subr.bf16.mxu0 0
    %251 = vmatpush1.bf16.msra.mxu0 0
    %252 = vmatprep.subr.bf16.mxu0 0
    %253 = vmatpush1.bf16.msra.mxu0 0
    %254 = vmatprep.subr.bf16.mxu0 0
    %255 = vmatpush1.bf16.msra.mxu0 0
    %256 = vmatprep.subr.bf16.mxu0 0
    %257 = vmatpush1.bf16.msra.mxu0 0
    %258 = vmatprep.subr.bf16.mxu0 0
    %259 = vmatpush1.bf16.msra.mxu0 0
    %260 = vmatprep.subr.bf16.mxu0 0
    %261 = vmatpush1.bf16.msra.mxu0 0
    %262 = vmatprep.subr.bf16.mxu0 0
    %263 = vmatpush1.bf16.msra.mxu0 0
    %264 = vmatprep.subr.bf16.mxu0 0
    %265 = vmatpush1.bf16.msra.mxu0 0
    %266 = vmatprep.subr.bf16.mxu0 0
    %267 = vmatpush1.bf16.msra.mxu0 0
    %268 = vmatprep.subr.bf16.mxu0 0
    %269 = vmatpush1.bf16.msra.mxu0 0
    %270 = vmatprep.subr.bf16.mxu0 0
    %271 = vmatpush1.bf16.msra.mxu0 0
    %272 = vmatprep.mubr.bf16.mxu0 0
    %273 = vmatmul.mubr.bf16.gmra.mrb[0].mxu0 %v229
    %v274 = vpop.f32.mrb[0].mxu0
    %v275 = vadd.f32 0.0, %v274
    %v276 = vpop.f32.mrb[0].mxu0
    %v277 = vpop.f32.mrb[0].mxu0
    %v278 = vadd.f32 0.0, %v277
    %v279 = vpop.f32.mrb[0].mxu0
    %280 = vmatprep.mubr.bf16.mxu0 0
    %281 = vmatmul.mubr.bf16.gmra.mrb[0].mxu0 %v232
    %v282 = vpop.f32.mrb[0].mxu0
    %v283 = vadd.f32 0.0, %v282
    %v284 = vpop.f32.mrb[0].mxu0
    %v285 = vpop.f32.mrb[0].mxu0
    %v286 = vadd.f32 0.0, %v285
    %v287 = vpop.f32.mrb[0].mxu0
    %288 = vmatprep.mubr.bf16.mxu0 0
    %289 = vmatmul.mubr.bf16.gmra.mrb[0].mxu0 %v235
    %v290 = vpop.f32.mrb[0].mxu0
    %v291 = vadd.f32 0.0, %v290
    %v292 = vpop.f32.mrb[0].mxu0
    %v293 = vpop.f32.mrb[0].mxu0
    %v294 = vadd.f32 0.0, %v293
    %v295 = vpop.f32.mrb[0].mxu0
    %296 = vmatprep.mubr.bf16.mxu0 0
    %297 = vmatmul.mubr.bf16.gmra.mrb[0].mxu0 %v238
    %v298 = vpop.f32.mrb[0].mxu0
    %v299 = vadd.f32 0.0, %v298
    %v300 = vpop.f32.mrb[0].mxu0
    %v301 = vpop.f32.mrb[0].mxu0
    %v302 = vadd.f32 0.0, %v301
    %v303 = vpop.f32.mrb[0].mxu0
    %304 = vdwg.mxu0
    %v313 = vunpack.c.l.b16 %v149
    %v314 = vunpack.c.l.b16 %v150
    %v315 = vunpack.c.l.b16 %v151
    %v316 = vunpack.c.l.b16 %v152
    %v317 = vunpack.c.l.b16 %v153
    %v318 = vunpack.c.l.b16 %v154
    %v319 = vunpack.c.l.b16 %v155
    %v320 = vunpack.c.l.b16 %v156
    %v321 = vpack.c.b16 %v314, %v313
    %v322 = vpack.c.b16 %v316, %v315
    %v323 = vpack.c.b16 %v318, %v317
    %v324 = vpack.c.b16 %v320, %v319
    %v329 = vunpack.c.l.b16 %v165
    %v330 = vunpack.c.l.b16 %v166
    %v331 = vunpack.c.l.b16 %v167
    %v332 = vunpack.c.l.b16 %v168
    %v333 = vpack.c.b16 %v330, %v329
    %v334 = vpack.c.b16 %v332, %v331
    %v338 = vsel %vm227, %v321, 0
    %v341 = vsel %vm227, %v322, 0
    %v344 = vsel %vm227, %v323, 0
    %v347 = vsel %vm227, %v324, 0
    %349 = vmatprep.subr.bf16.mxu0 0
    %350 = vmatpush1.bf16.msra.mxu0 %v333
    %351 = vmatprep.subr.bf16.mxu0 0
    %352 = vmatpush1.bf16.msra.mxu0 %v334
    %353 = vmatprep.subr.bf16.mxu0 0
    %354 = vmatpush1.bf16.msra.mxu0 0
    %355 = vmatprep.subr.bf16.mxu0 0
    %356 = vmatpush1.bf16.msra.mxu0 0
    %357 = vmatprep.subr.bf16.mxu0 0
    %358 = vmatpush1.bf16.msra.mxu0 0
    %359 = vmatprep.subr.bf16.mxu0 0
    %360 = vmatpush1.bf16.msra.mxu0 0
    %361 = vmatprep.subr.bf16.mxu0 0
    %362 = vmatpush1.bf16.msra.mxu0 0
    %363 = vmatprep.subr.bf16.mxu0 0
    %364 = vmatpush1.bf16.msra.mxu0 0
    %365 = vmatprep.subr.bf16.mxu0 0
    %366 = vmatpush1.bf16.msra.mxu0 0
    %367 = vmatprep.subr.bf16.mxu0 0
    %368 = vmatpush1.bf16.msra.mxu0 0
    %369 = vmatprep.subr.bf16.mxu0 0
    %370 = vmatpush1.bf16.msra.mxu0 0
    %371 = vmatprep.subr.bf16.mxu0 0
    %372 = vmatpush1.bf16.msra.mxu0 0
    %373 = vmatprep.subr.bf16.mxu0 0
    %374 = vmatpush1.bf16.msra.mxu0 0
    %375 = vmatprep.subr.bf16.mxu0 0
    %376 = vmatpush1.bf16.msra.mxu0 0
    %377 = vmatprep.subr.bf16.mxu0 0
    %378 = vmatpush1.bf16.msra.mxu0 0
    %379 = vmatprep.subr.bf16.mxu0 0
    %380 = vmatpush1.bf16.msra.mxu0 0
    %381 = vmatprep.mubr.bf16.mxu0 0
    %382 = vmatmul.mubr.bf16.gmra.mrb[0].mxu0 %v338
    %v383 = vpop.f32.mrb[0].mxu0
    %v384 = vadd.f32 %v275, %v383
    %v385 = vpop.f32.mrb[0].mxu0
    %v386 = vpop.f32.mrb[0].mxu0
    %v387 = vadd.f32 %v278, %v386
    %v388 = vpop.f32.mrb[0].mxu0
    %389 = vmatprep.mubr.bf16.mxu0 0
    %390 = vmatmul.mubr.bf16.gmra.mrb[0].mxu0 %v341
    %v391 = vpop.f32.mrb[0].mxu0
    %v392 = vadd.f32 %v283, %v391
    %v393 = vpop.f32.mrb[0].mxu0
    %v394 = vpop.f32.mrb[0].mxu0
    %v395 = vadd.f32 %v286, %v394
    %v396 = vpop.f32.mrb[0].mxu0
    %397 = vmatprep.mubr.bf16.mxu0 0
    %398 = vmatmul.mubr.bf16.gmra.mrb[0].mxu0 %v344
    %v399 = vpop.f32.mrb[0].mxu0
    %v400 = vadd.f32 %v291, %v399
    %v401 = vpop.f32.mrb[0].mxu0
    %v402 = vpop.f32.mrb[0].mxu0
    %v403 = vadd.f32 %v294, %v402
    %v404 = vpop.f32.mrb[0].mxu0
    %405 = vmatprep.mubr.bf16.mxu0 0
    %406 = vmatmul.mubr.bf16.gmra.mrb[0].mxu0 %v347
    %v407 = vpop.f32.mrb[0].mxu0
    %v408 = vadd.f32 %v299, %v407
    %v409 = vpop.f32.mrb[0].mxu0
    %v410 = vpop.f32.mrb[0].mxu0
    %v411 = vadd.f32 %v302, %v410
    %v412 = vpop.f32.mrb[0].mxu0
    %413 = vdwg.mxu0
    %s414 = scalar_lea.vmem [#allocation14], 48
    %v415 = vld [vmem:[%s414] sm:$0xf]
    %v416 = vld [vmem:[%s414 + $0x4] sm:$0xf]
    %v417 = vld [vmem:[%s414 + $0x8] sm:$0xf]
    %v418 = vld [vmem:[%s414 + $0xc] sm:$0xf]
    %v427 = vunpack.c.l.b16 %v182
    %v428 = vunpack.c.l.b16 %v183
    %v429 = vunpack.c.l.b16 %v184
    %v430 = vunpack.c.l.b16 %v185
    %v431 = vunpack.c.l.b16 %v186
    %v432 = vunpack.c.l.b16 %v187
    %v433 = vunpack.c.l.b16 %v188
    %v434 = vunpack.c.l.b16 %v189
    %v435 = vpack.c.b16 %v428, %v427
    %v436 = vpack.c.b16 %v430, %v429
    %v437 = vpack.c.b16 %v432, %v431
    %v438 = vpack.c.b16 %v434, %v433
    %v443 = vunpack.c.l.b16 %v415
    %v444 = vunpack.c.l.b16 %v416
    %v445 = vunpack.c.l.b16 %v417
    %v446 = vunpack.c.l.b16 %v418
    %v447 = vpack.c.b16 %v444, %v443
    %v448 = vpack.c.b16 %v446, %v445
    %v452 = vsel %vm227, %v435, 0
    %v455 = vsel %vm227, %v436, 0
    %v458 = vsel %vm227, %v437, 0
    %v461 = vsel %vm227, %v438, 0
    %463 = vmatprep.subr.bf16.mxu0 0
    %464 = vmatpush1.bf16.msra.mxu0 %v447
    %465 = vmatprep.subr.bf16.mxu0 0
    %466 = vmatpush1.bf16.msra.mxu0 %v448
    %467 = vmatprep.subr.bf16.mxu0 0
    %468 = vmatpush1.bf16.msra.mxu0 0
    %469 = vmatprep.subr.bf16.mxu0 0
    %470 = vmatpush1.bf16.msra.mxu0 0
    %471 = vmatprep.subr.bf16.mxu0 0
    %472 = vmatpush1.bf16.msra.mxu0 0
    %473 = vmatprep.subr.bf16.mxu0 0
    %474 = vmatpush1.bf16.msra.mxu0 0
    %475 = vmatprep.subr.bf16.mxu0 0
    %476 = vmatpush1.bf16.msra.mxu0 0
    %477 = vmatprep.subr.bf16.mxu0 0
    %478 = vmatpush1.bf16.msra.mxu0 0
    %479 = vmatprep.subr.bf16.mxu0 0
    %480 = vmatpush1.bf16.msra.mxu0 0
    %481 = vmatprep.subr.bf16.mxu0 0
    %482 = vmatpush1.bf16.msra.mxu0 0
    %483 = vmatprep.subr.bf16.mxu0 0
    %484 = vmatpush1.bf16.msra.mxu0 0
    %485 = vmatprep.subr.bf16.mxu0 0
    %486 = vmatpush1.bf16.msra.mxu0 0
    %487 = vmatprep.subr.bf16.mxu0 0
    %488 = vmatpush1.bf16.msra.mxu0 0
    %489 = vmatprep.subr.bf16.mxu0 0
    %490 = vmatpush1.bf16.msra.mxu0 0
    %491 = vmatprep.subr.bf16.mxu0 0
    %492 = vmatpush1.bf16.msra.mxu0 0
    %493 = vmatprep.subr.bf16.mxu0 0
    %494 = vmatpush1.bf16.msra.mxu0 0
    %495 = vmatprep.mubr.bf16.mxu0 0
    %496 = vmatmul.mubr.bf16.gmra.mrb[0].mxu0 %v452
    %v497 = vpop.f32.mrb[0].mxu0
    %v498 = vadd.f32 0.0, %v497
    %v499 = vpop.f32.mrb[0].mxu0
    %v500 = vpop.f32.mrb[0].mxu0
    %v501 = vadd.f32 0.0, %v500
    %v502 = vpop.f32.mrb[0].mxu0
    %503 = vmatprep.mubr.bf16.mxu0 0
    %504 = vmatmul.mubr.bf16.gmra.mrb[0].mxu0 %v455
    %v505 = vpop.f32.mrb[0].mxu0
    %v506 = vadd.f32 0.0, %v505
    %v507 = vpop.f32.mrb[0].mxu0
    %v508 = vpop.f32.mrb[0].mxu0
    %v509 = vadd.f32 0.0, %v508
    %v510 = vpop.f32.mrb[0].mxu0
    %511 = vmatprep.mubr.bf16.mxu0 0
    %512 = vmatmul.mubr.bf16.gmra.mrb[0].mxu0 %v458
    %v513 = vpop.f32.mrb[0].mxu0
    %v514 = vadd.f32 0.0, %v513
    %v515 = vpop.f32.mrb[0].mxu0
    %v516 = vpop.f32.mrb[0].mxu0
    %v517 = vadd.f32 0.0, %v516
    %v518 = vpop.f32.mrb[0].mxu0
    %519 = vmatprep.mubr.bf16.mxu0 0
    %520 = vmatmul.mubr.bf16.gmra.mrb[0].mxu0 %v461
    %v521 = vpop.f32.mrb[0].mxu0
    %v522 = vadd.f32 0.0, %v521
    %v523 = vpop.f32.mrb[0].mxu0
    %v524 = vpop.f32.mrb[0].mxu0
    %v525 = vadd.f32 0.0, %v524
    %v526 = vpop.f32.mrb[0].mxu0
    %527 = vdwg.mxu0
    %v536 = vunpack.c.l.b16 %v157
    %v537 = vunpack.c.l.b16 %v158
    %v538 = vunpack.c.l.b16 %v159
    %v539 = vunpack.c.l.b16 %v160
    %v540 = vunpack.c.l.b16 %v161
    %v541 = vunpack.c.l.b16 %v162
    %v542 = vunpack.c.l.b16 %v163
    %v543 = vunpack.c.l.b16 %v164
    %v544 = vpack.c.b16 %v537, %v536
    %v545 = vpack.c.b16 %v539, %v538
    %v546 = vpack.c.b16 %v541, %v540
    %v547 = vpack.c.b16 %v543, %v542
    %v552 = vunpack.c.l.b16 %v170
    %v553 = vunpack.c.l.b16 %v171
    %v554 = vunpack.c.l.b16 %v172
    %v555 = vunpack.c.l.b16 %v173
    %v556 = vpack.c.b16 %v553, %v552
    %v557 = vpack.c.b16 %v555, %v554
    %v561 = vsel %vm227, %v544, 0
    %v564 = vsel %vm227, %v545, 0
    %v567 = vsel %vm227, %v546, 0
    %v570 = vsel %vm227, %v547, 0
    %572 = vmatprep.subr.bf16.mxu0 0
    %573 = vmatpush1.bf16.msra.mxu0 %v556
    %574 = vmatprep.subr.bf16.mxu0 0
    %575 = vmatpush1.bf16.msra.mxu0 %v557
    %576 = vmatprep.subr.bf16.mxu0 0
    %577 = vmatpush1.bf16.msra.mxu0 0
    %578 = vmatprep.subr.bf16.mxu0 0
    %579 = vmatpush1.bf16.msra.mxu0 0
    %580 = vmatprep.subr.bf16.mxu0 0
    %581 = vmatpush1.bf16.msra.mxu0 0
    %582 = vmatprep.subr.bf16.mxu0 0
    %583 = vmatpush1.bf16.msra.mxu0 0
    %584 = vmatprep.subr.bf16.mxu0 0
    %585 = vmatpush1.bf16.msra.mxu0 0
    %586 = vmatprep.subr.bf16.mxu0 0
    %587 = vmatpush1.bf16.msra.mxu0 0
    %588 = vmatprep.subr.bf16.mxu0 0
    %589 = vmatpush1.bf16.msra.mxu0 0
    %590 = vmatprep.subr.bf16.mxu0 0
    %591 = vmatpush1.bf16.msra.mxu0 0
    %592 = vmatprep.subr.bf16.mxu0 0
    %593 = vmatpush1.bf16.msra.mxu0 0
    %594 = vmatprep.subr.bf16.mxu0 0
    %595 = vmatpush1.bf16.msra.mxu0 0
    %596 = vmatprep.subr.bf16.mxu0 0
    %597 = vmatpush1.bf16.msra.mxu0 0
    %598 = vmatprep.subr.bf16.mxu0 0
    %599 = vmatpush1.bf16.msra.mxu0 0
    %600 = vmatprep.subr.bf16.mxu0 0
    %601 = vmatpush1.bf16.msra.mxu0 0
    %602 = vmatprep.subr.bf16.mxu0 0
    %603 = vmatpush1.bf16.msra.mxu0 0
    %604 = vmatprep.mubr.bf16.mxu0 0
    %605 = vmatmul.mubr.bf16.gmra.mrb[0].mxu0 %v561
    %v606 = vpop.f32.mrb[0].mxu0
    %v607 = vadd.f32 %v498, %v606
    %v608 = vpop.f32.mrb[0].mxu0
    %v609 = vpop.f32.mrb[0].mxu0
    %v610 = vadd.f32 %v501, %v609
    %v611 = vpop.f32.mrb[0].mxu0
    %612 = vmatprep.mubr.bf16.mxu0 0
    %613 = vmatmul.mubr.bf16.gmra.mrb[0].mxu0 %v564
    %v614 = vpop.f32.mrb[0].mxu0
    %v615 = vadd.f32 %v506, %v614
    %v616 = vpop.f32.mrb[0].mxu0
    %v617 = vpop.f32.mrb[0].mxu0
    %v618 = vadd.f32 %v509, %v617
    %v619 = vpop.f32.mrb[0].mxu0
    %620 = vmatprep.mubr.bf16.mxu0 0
    %621 = vmatmul.mubr.bf16.gmra.mrb[0].mxu0 %v567
    %v622 = vpop.f32.mrb[0].mxu0
    %v623 = vadd.f32 %v514, %v622
    %v624 = vpop.f32.mrb[0].mxu0
    %v625 = vpop.f32.mrb[0].mxu0
    %v626 = vadd.f32 %v517, %v625
    %v627 = vpop.f32.mrb[0].mxu0
    %628 = vmatprep.mubr.bf16.mxu0 0
    %629 = vmatmul.mubr.bf16.gmra.mrb[0].mxu0 %v570
    %v630 = vpop.f32.mrb[0].mxu0
    %v631 = vadd.f32 %v522, %v630
    %v632 = vpop.f32.mrb[0].mxu0
    %v633 = vpop.f32.mrb[0].mxu0
    %v634 = vadd.f32 %v525, %v633
    %v635 = vpop.f32.mrb[0].mxu0
    %636 = vdwg.mxu0
    %v637 = vld [vmem:[#allocation17] sm:$0x1]
    %v639 = vlaneseq
    %v640 = vshrl.u32 %v639, 7
    %v641 = vsub.s32 0, %v640
    %v642 = vrot.slane %v637, %v641
    %v644 = vadd.f32 %v384, %v642
    %v645 = vadd.f32 %v387, %v642
    %v646 = vadd.f32 %v392, %v642
    %v647 = vadd.f32 %v395, %v642
    %v648 = vadd.f32 %v400, %v642
    %v649 = vadd.f32 %v403, %v642
    %v650 = vadd.f32 %v408, %v642
    %v651 = vadd.f32 %v411, %v642
    %652 = vst [vmem:[#allocation2] sm:$0xff] %v644
    %653 = vst [vmem:[#allocation2 + $0x8] sm:$0xff] %v645
    %654 = vst [vmem:[#allocation2 + $0x10] sm:$0xff] %v646
    %655 = vst [vmem:[#allocation2 + $0x18] sm:$0xff] %v647
    %656 = vst [vmem:[#allocation2 + $0x20] sm:$0xff] %v648
    %657 = vst [vmem:[#allocation2 + $0x28] sm:$0xff] %v649
    %658 = vst [vmem:[#allocation2 + $0x30] sm:$0xff] %v650
    %659 = vst [vmem:[#allocation2 + $0x38] sm:$0xff] %v651
    %s660 = scalar_lea.vmem [#allocation17], 1
    %v661 = vld [vmem:[%s660] sm:$0x1]
    %v663 = vlaneseq
    %v664 = vshrl.u32 %v663, 7
    %v665 = vsub.s32 0, %v664
    %v666 = vrot.slane %v661, %v665
    %v668 = vadd.f32 %v607, %v666
    %v669 = vadd.f32 %v610, %v666
    %v670 = vadd.f32 %v615, %v666
    %v671 = vadd.f32 %v618, %v666
    %v672 = vadd.f32 %v623, %v666
    %v673 = vadd.f32 %v626, %v666
    %v674 = vadd.f32 %v631, %v666
    %v675 = vadd.f32 %v634, %v666
    %676 = vst [vmem:[#allocation3] sm:$0xff] %v668
    %677 = vst [vmem:[#allocation3 + $0x8] sm:$0xff] %v669
    %678 = vst [vmem:[#allocation3 + $0x10] sm:$0xff] %v670
    %679 = vst [vmem:[#allocation3 + $0x18] sm:$0xff] %v671
    %680 = vst [vmem:[#allocation3 + $0x20] sm:$0xff] %v672
    %681 = vst [vmem:[#allocation3 + $0x28] sm:$0xff] %v673
    %682 = vst [vmem:[#allocation3 + $0x30] sm:$0xff] %v674
    %683 = vst [vmem:[#allocation3 + $0x38] sm:$0xff] %v675
    %v684 = vld [vmem:[#allocation15] sm:$0xf]
    %v685 = vld [vmem:[#allocation15 + $0x4] sm:$0xf]
    %v686 = vld [vmem:[#allocation15 + $0x8] sm:$0xf]
    %v687 = vld [vmem:[#allocation15 + $0xc] sm:$0xf]
    %s688 = scalar_lea.vmem [#allocation15], 16
    %v689 = vld [vmem:[%s688] sm:$0xf]
    %v690 = vld [vmem:[%s688 + $0x4] sm:$0xf]
    %v691 = vld [vmem:[%s688 + $0x8] sm:$0xf]
    %v692 = vld [vmem:[%s688 + $0xc] sm:$0xf]
    loop: start=0, step=1, limit=8
    $region62: #{elmo_forward.7} parent=1 // loop_pre_header
      _
    $region63: #{elmo_forward.7} parent=1 // loop_header
      %s694 = sphi 0, %s698
      %p695 = scmp.ge.s32.totalorder %s694, 8
    $region64: #{elmo_forward.7} parent=1 // loop_header_branch
      %697 = sbr.rel (%p695) target = $region68
    $region65: #{elmo_forward.7} parent=1 // loop_body
      %s699 = ssub.s32 7, %s694
      %s700 = smul.u32 %s694, 8
      %s701 = scalar_lea.vmem [#allocation2], %s700
      %v702 = vld [vmem:[%s701] sm:$0xff]
      %v703 = vld [vmem:[#allocation4] sm:$0xff]
      %v704 = vpack.c.bf16 %v703, %v703
      %v709 = vunpack.c.l.b16 %v684
      %v710 = vunpack.c.l.b16 %v685
      %v711 = vunpack.c.l.b16 %v686
      %v712 = vunpack.c.l.b16 %v687
      %v713 = vpack.c.b16 %v710, %v709
      %v714 = vpack.c.b16 %v712, %v711
      %v718 = vsel %vm227, %v704, 0
      %720 = vmatprep.subr.bf16.mxu0 0
      %721 = vmatpush1.bf16.msra.mxu0 %v713
      %722 = vmatprep.subr.bf16.mxu0 0
      %723 = vmatpush1.bf16.msra.mxu0 %v714
      %724 = vmatprep.subr.bf16.mxu0 0
      %725 = vmatpush1.bf16.msra.mxu0 0
      %726 = vmatprep.subr.bf16.mxu0 0
      %727 = vmatpush1.bf16.msra.mxu0 0
      %728 = vmatprep.subr.bf16.mxu0 0
      %729 = vmatpush1.bf16.msra.mxu0 0
      %730 = vmatprep.subr.bf16.mxu0 0
      %731 = vmatpush1.bf16.msra.mxu0 0
      %732 = vmatprep.subr.bf16.mxu0 0
      %733 = vmatpush1.bf16.msra.mxu0 0
      %734 = vmatprep.subr.bf16.mxu0 0
      %735 = vmatpush1.bf16.msra.mxu0 0
      %736 = vmatprep.subr.bf16.mxu0 0
      %737 = vmatpush1.bf16.msra.mxu0 0
      %738 = vmatprep.subr.bf16.mxu0 0
      %739 = vmatpush1.bf16.msra.mxu0 0
      %740 = vmatprep.subr.bf16.mxu0 0
      %741 = vmatpush1.bf16.msra.mxu0 0
      %742 = vmatprep.subr.bf16.mxu0 0
      %743 = vmatpush1.bf16.msra.mxu0 0
      %744 = vmatprep.subr.bf16.mxu0 0
      %745 = vmatpush1.bf16.msra.mxu0 0
      %746 = vmatprep.subr.bf16.mxu0 0
      %747 = vmatpush1.bf16.msra.mxu0 0
      %748 = vmatprep.subr.bf16.mxu0 0
      %749 = vmatpush1.bf16.msra.mxu0 0
      %750 = vmatprep.subr.bf16.mxu0 0
      %751 = vmatpush1.bf16.msra.mxu0 0
      %752 = vmatprep.mubr.bf16.mxu0 0
      %753 = vmatmul.mubr.bf16.gmra.mrb[0].mxu0 %v718
      %v754 = vpop.f32.mrb[0].mxu0
      %v755 = vadd.f32 0.0, %v754
      %v756 = vpop.f32.mrb[0].mxu0
      %v757 = vpop.f32.mrb[0].mxu0
      %v758 = vpop.f32.mrb[0].mxu0
      %759 = vdwg.mxu0
      %v760 = vadd.f32 %v702, %v755
      %s761 = smul.u32 %s699, 8
      %s762 = scalar_lea.vmem [#allocation3], %s761
      %v763 = vld [vmem:[%s762] sm:$0xff]
      %s764 = scalar_lea.vmem [#allocation4], 8
      %v765 = vld [vmem:[%s764] sm:$0xff]
      %v766 = vpack.c.bf16 %v765, %v765
      %v771 = vunpack.c.l.b16 %v689
      %v772 = vunpack.c.l.b16 %v690
      %v773 = vunpack.c.l.b16 %v691
      %v774 = vunpack.c.l.b16 %v692
      %v775 = vpack.c.b16 %v772, %v771
      %v776 = vpack.c.b16 %v774, %v773
      %v780 = vsel %vm227, %v766, 0
      %782 = vmatprep.subr.bf16.mxu0 0
      %783 = vmatpush1.bf16.msra.mxu0 %v775
      %784 = vmatprep.subr.bf16.mxu0 0
      %785 = vmatpush1.bf16.msra.mxu0 %v776
      %786 = vmatprep.subr.bf16.mxu0 0
      %787 = vmatpush1.bf16.msra.mxu0 0
      %788 = vmatprep.subr.bf16.mxu0 0
      %789 = vmatpush1.bf16.msra.mxu0 0
      %790 = vmatprep.subr.bf16.mxu0 0
      %791 = vmatpush1.bf16.msra.mxu0 0
      %792 = vmatprep.subr.bf16.mxu0 0
      %793 = vmatpush1.bf16.msra.mxu0 0
      %794 = vmatprep.subr.bf16.mxu0 0
      %795 = vmatpush1.bf16.msra.mxu0 0
      %796 = vmatprep.subr.bf16.mxu0 0
      %797 = vmatpush1.bf16.msra.mxu0 0
      %798 = vmatprep.subr.bf16.mxu0 0
      %799 = vmatpush1.bf16.msra.mxu0 0
      %800 = vmatprep.subr.bf16.mxu0 0
      %801 = vmatpush1.bf16.msra.mxu0 0
      %802 = vmatprep.subr.bf16.mxu0 0
      %803 = vmatpush1.bf16.msra.mxu0 0
      %804 = vmatprep.subr.bf16.mxu0 0
      %805 = vmatpush1.bf16.msra.mxu0 0
      %806 = vmatprep.subr.bf16.mxu0 0
      %807 = vmatpush1.bf16.msra.mxu0 0
      %808 = vmatprep.subr.bf16.mxu0 0
      %809 = vmatpush1.bf16.msra.mxu0 0
      %810 = vmatprep.subr.bf16.mxu0 0
      %811 = vmatpush1.bf16.msra.mxu0 0
      %812 = vmatprep.subr.bf16.mxu0 0
      %813 = vmatpush1.bf16.msra.mxu0 0
      %814 = vmatprep.mubr.bf16.mxu0 0
      %815 = vmatmul.mubr.bf16.gmra.mrb[0].mxu0 %v780
      %v816 = vpop.f32.mrb[0].mxu0
      %v817 = vadd.f32 0.0, %v816
      %v818 = vpop.f32.mrb[0].mxu0
      %v819 = vpop.f32.mrb[0].mxu0
      %v820 = vpop.f32.mrb[0].mxu0
      %821 = vdwg.mxu0
      %v822 = vadd.f32 %v763, %v817
      %v823 = vld [vmem:[#allocation5] sm:$0xff]
      %v824 = vmul.f32 %v760, 0.5
      %v825 = vtanh.pop %v824
      %v826 = vmul.f32 %v825, 0.5
      %v827 = vadd.f32 %v826, 0.5
      %v828 = vtanh.pop %v760
      %830 = vrot.lane.b32.xlu0 %v823, 32
      %v831 = vpop.permute.xlu0 %830
      %v833 = vmul.f32 %v827, %v831
      %835 = vrot.lane.b32.xlu0 %v828, 64
      %v836 = vpop.permute.xlu0 %835
      %v838 = vmul.f32 %v827, %v836
      %840 = vrot.lane.b32.xlu0 %v838, 32
      %v841 = vpop.permute.xlu0 %840
      %v843 = vadd.f32 %v833, %v841
      %v844 = vtanh.pop %v843
      %846 = vrot.lane.b32.xlu0 %v844, 64
      %v847 = vpop.permute.xlu0 %846
      %v849 = vmul.f32 %v827, %v847
      %s850 = scalar_lea.vmem [#allocation5], 8
      %v851 = vld [vmem:[%s850] sm:$0xff]
      %v852 = vmul.f32 %v822, 0.5
      %v853 = vtanh.pop %v852
      %v854 = vmul.f32 %v853, 0.5
      %v855 = vadd.f32 %v854, 0.5
      %v856 = vtanh.pop %v822
      %858 = vrot.lane.b32.xlu0 %v851, 32
      %v859 = vpop.permute.xlu0 %858
      %v861 = vmul.f32 %v855, %v859
      %863 = vrot.lane.b32.xlu0 %v856, 64
      %v864 = vpop.permute.xlu0 %863
      %v866 = vmul.f32 %v855, %v864
      %868 = vrot.lane.b32.xlu0 %v866, 32
      %v869 = vpop.permute.xlu0 %868
      %v871 = vadd.f32 %v861, %v869
      %v872 = vtanh.pop %v871
      %874 = vrot.lane.b32.xlu0 %v872, 64
      %v875 = vpop.permute.xlu0 %874
      %v877 = vmul.f32 %v855, %v875
      %879 = vrot.lane.b32.xlu0 %v849, 32
      %v880 = vpop.permute.xlu0 %879
      %882 = vst.msk [vmem:[#allocation4] sm:$0xff] %vm227, %v880
      %884 = vrot.lane.b32.xlu0 %v843, 96
      %v885 = vpop.permute.xlu0 %884
      %887 = vst.msk [vmem:[#allocation5] sm:$0xff] %vm227, %v885
      %889 = vrot.lane.b32.xlu0 %v877, 32
      %v890 = vpop.permute.xlu0 %889
      %892 = vst.msk [vmem:[%s764] sm:$0xff] %vm227, %v890
      %894 = vrot.lane.b32.xlu0 %v871, 96
      %v895 = vpop.permute.xlu0 %894
      %897 = vst.msk [vmem:[%s850] sm:$0xff] %vm227, %v895
      %v898 = vpack.c.bf16 %v849, %v849
      %v900 = vunpack.c.l.b16 %v898
      %v901 = vpack.c.b16 %v900, %v900
      %902 = vrot.lane.b32.xlu0 %v901, 32
      %v903 = vpop.permute.xlu0 %902
      %s905 = smul.addr %s694, 4
      %s906 = scalar_lea.vmem [#allocation18], %s905
      %vm907 = vcmask 257024
      %908 = vst.msk [vmem:[%s906] sm:$0xf] %vm907, %v903
      %v909 = vpack.c.bf16 %v877, %v877
      %v911 = vunpack.c.l.b16 %v909
      %v912 = vpack.c.b16 %v911, %v911
      %913 = vrot.lane.b32.xlu0 %v912, 32
      %v914 = vpop.permute.xlu0 %913
      %s916 = smul.addr %s699, 4
      %s917 = scalar_lea.vmem [#allocation19], %s916
      %918 = vst.msk [vmem:[%s917] sm:$0xf] %vm907, %v914
    $region66: #{elmo_forward.7} parent=1 // loop_footer
      %s698 = sadd.s32 1, %s694
    $region67: #{elmo_forward.7} parent=1 // loop_footer_branch
      %693 = sbr.rel target = $region63
    $region68: #{elmo_forward.7} parent=1 // loop_exit
      _
    // Predicated region
    $region69: #{elmo_forward.7} parent=1 // pred_check
      _
    $region70: #{elmo_forward.7} parent=1 // pred_check_branch
      %920 = sbr.rel (0) target = $region72
    $region71: #{elmo_forward.7} parent=1 // pred_region
      %s922 = ssub.s32 512, 512
      %923 = vsyncadd [#allocation8], %s922
      %s924 = sshll.u32 [#allocation18], 4
      %s925 = int_to_ptr.vmem [resolvable:$true] %s924
      %930 = dma.vmem_to_hbm [thread:$0]  %s925, 512, %s7, [#allocation8], 64, 64, 4
    $region72: #{elmo_forward.7} parent=1 // pred_fallthru
      _
    // Predicated region
    $region73: #{elmo_forward.7} parent=1 // pred_check
      _
    $region74: #{elmo_forward.7} parent=1 // pred_check_branch
      %932 = sbr.rel (0) target = $region76
    $region75: #{elmo_forward.7} parent=1 // pred_region
      %s933 = ssub.s32 0, 0
      %s934 = smul.u32 8, %s933
      %s936 = ssub.s32 512, 512
      %937 = vsyncadd [#allocation20], %s936
      %s938 = smul.addr %s934, 64
      %s939 = scalar_lea.hbm %s8, %s938
      %s940 = sshll.u32 [#allocation19], 4
      %s941 = int_to_ptr.vmem [resolvable:$true] %s940
      %946 = dma.vmem_to_hbm [thread:$0]  %s941, 512, %s939, [#allocation20], 64, 64, 4
    $region76: #{elmo_forward.7} parent=1 // pred_fallthru
      _
    // Predicated region
    $region77: #{elmo_forward.7} parent=1 // pred_check
      _
    $region78: #{elmo_forward.7} parent=1 // pred_check_branch
      %948 = sbr.rel (0) target = $region80
    $region79: #{elmo_forward.7} parent=1 // pred_region
      %949 = dma.done [#allocation8], 512
    $region80: #{elmo_forward.7} parent=1 // pred_fallthru
      _
    // Predicated region
    $region81: #{elmo_forward.7} parent=1 // pred_check
      _
    $region82: #{elmo_forward.7} parent=1 // pred_check_branch
      %951 = sbr.rel (0) target = $region84
    $region83: #{elmo_forward.7} parent=1 // pred_region
      %952 = dma.done [#allocation20], 512
    $region84: #{elmo_forward.7} parent=1 // pred_fallthru
      _
    %953 = vsyncpa [#allocation7], 1
    %954 = vsyncpa [#allocation10], 1
    %955 = vsyncpa [#allocation13], 1
    %956 = vsyncpa [#allocation16], 1
    %957 = vsyncpa [#allocation8], 1
    %958 = vsyncpa [#allocation20], 1

</llo_original>
